<compile_context>
chip_gen: v7x
topology: tpu7x:2x2x1
jax: 0.10.0
libtpu: 0.0.40
codegen_flags: <defaults>
</compile_context>

<pallas_src>
import functools

import jax
import jax.numpy as jnp
import numpy as np
from jax.experimental import pallas as pl
from jax.experimental.pallas import tpu as pltpu

# ---------------------------------------------------------------------------
# configuration (Layer(n_heads, n_model, n_embed, n_inner))
# ---------------------------------------------------------------------------
B = 2          # batch
S = 8          # seq_len
N_MODEL = 32   # n_model
N_HEADS = 4    # n_heads
N_EMBED = 8    # n_embed (per-head dim)
N_INNER = 64   # n_inner
LN_EPS = 1e-5


def _layer_norm(y):
    mu = jnp.mean(y, axis=-1, keepdims=True)
    var = jnp.mean(jnp.square(y - mu), axis=-1, keepdims=True)
    # LayerNorm affine params are ones/zeros at init -> identity affine.
    return (y - mu) * jax.lax.rsqrt(var + LN_EPS)


# ---------------------------------------------------------------------------
# Fused kernel: QKV proj -> multi-head attention -> out proj -> +res -> LN
#               -> FFN (w1 -> relu -> w2) -> +res -> LN
# grid over batch; one batch element per program (parallel across TCs on v7x).
# ---------------------------------------------------------------------------
def layer_kernel(x_ref, bias_ref, wqkv_ref, wo_ref, w1_ref, b1_ref, w2_ref,
                 b2_ref, o_ref, *, n_heads, n_embed):
    x = x_ref[0]                         # [S, M]
    bias = bias_ref[...]                 # [1, 1, S]  additive key-mask bias
    scale = 1.0 / (n_embed ** 0.5)

    # ---- attention -------------------------------------------------------
    # single batched QKV projection: [3H, S, M] x [3H, M, E] -> [3H, S, E]
    xb = jnp.broadcast_to(x[None], (3 * n_heads,) + x.shape)
    qkv = jnp.einsum('hsm,hme->hse', xb, wqkv_ref[...],
                     preferred_element_type=jnp.float32)
    q = qkv[:n_heads] * scale            # [H, S, E]
    k = qkv[n_heads:2 * n_heads]         # [H, S, E]
    v = qkv[2 * n_heads:]                # [H, S, E]

    s = jnp.einsum('hqe,hke->hqk', q, k,
                   preferred_element_type=jnp.float32) + bias       # [H, S, S]
    s = s - jnp.max(s, axis=-1, keepdims=True)
    p = jnp.exp(s)
    p = p * pl.reciprocal(jnp.sum(p, axis=-1, keepdims=True), approx=True)
    # TODO(synk): attention dropout omitted (inference / eval semantics)
    ctx = jnp.einsum('hqk,hke->hqe', p, v,
                     preferred_element_type=jnp.float32)            # [H, S, E]

    # output projection per head, then reduce over heads (no concatenate)
    proj = jnp.einsum('hse,hem->hsm', ctx, wo_ref[...],
                      preferred_element_type=jnp.float32)           # [H, S, M]
    y1 = _layer_norm(jnp.sum(proj, axis=0) + x)                     # [S, M]

    # ---- position-wise FFN -----------------------------------------------
    h1 = jnp.maximum(
        jnp.dot(y1, w1_ref[...], preferred_element_type=jnp.float32)
        + b1_ref[...], 0.0)                                         # [S, INNER]
    y2 = (jnp.dot(h1, w2_ref[...], preferred_element_type=jnp.float32)
          + b2_ref[...] + y1)                                       # [S, M]
    o_ref[0] = _layer_norm(y2).astype(o_ref.dtype)


# ---------------------------------------------------------------------------
# wrapper
# ---------------------------------------------------------------------------
def transformer_layer(x, mask_bool, params):
    b, s, m = x.shape
    # additive mask bias computed once, outside the kernel
    bias = jnp.where(mask_bool, 0.0, -1e30).astype(jnp.float32).reshape(b, 1, s)

    def heads_view(w_t):  # [M, H*E] -> [H, M, E]
        return w_t.reshape(m, N_HEADS, N_EMBED).transpose(1, 0, 2)

    wqkv = jnp.concatenate(
        [heads_view(params["wq_t"]),
         heads_view(params["wk_t"]),
         heads_view(params["wv_t"])], axis=0)                  # [3H, M, E]
    wo = params["wo_t"].reshape(N_HEADS, N_EMBED, m)           # [H, E, M]

    kern = functools.partial(layer_kernel, n_heads=N_HEADS, n_embed=N_EMBED)
    return pl.pallas_call(
        kern,
        out_shape=jax.ShapeDtypeStruct((b, s, m), jnp.float32),
        grid_spec=pltpu.PrefetchScalarGridSpec(
            num_scalar_prefetch=0,
            grid=(b,),
            in_specs=[
                pl.BlockSpec((1, s, m), lambda i: (i, 0, 0)),          # x
                pl.BlockSpec((1, 1, s), lambda i: (i, 0, 0)),          # mask bias
                pl.BlockSpec(wqkv.shape, lambda i: (0, 0, 0)),         # wqkv
                pl.BlockSpec(wo.shape, lambda i: (0, 0, 0)),           # wo
                pl.BlockSpec(params["w1_t"].shape, lambda i: (0, 0)),  # w1
                pl.BlockSpec(params["b1"].shape, lambda i: (0, 0)),    # b1
                pl.BlockSpec(params["w2_t"].shape, lambda i: (0, 0)),  # w2
                pl.BlockSpec(params["b2"].shape, lambda i: (0, 0)),    # b2
            ],
            out_specs=pl.BlockSpec((1, s, m), lambda i: (i, 0, 0)),
        ),
        compiler_params=pltpu.CompilerParams(
            dimension_semantics=("parallel",)),
    )(x, bias, wqkv, wo, params["w1_t"], params["b1"],
      params["w2_t"], params["b2"])


# ---------------------------------------------------------------------------
# pure-JAX reference (mirrors the PyTorch forward, dropout = identity)
# ---------------------------------------------------------------------------
def reference(x, mask_bool, p):
    q = x @ p["wq_t"]
    k = x @ p["wk_t"]
    v = x @ p["wv_t"]
    q = q.reshape(B, S, N_HEADS, N_EMBED).transpose(2, 0, 1, 3)
    k = k.reshape(B, S, N_HEADS, N_EMBED).transpose(2, 0, 1, 3)
    v = v.reshape(B, S, N_HEADS, N_EMBED).transpose(2, 0, 1, 3)
    s = jnp.einsum("hbqd,hbkd->hbqk", q, k) / (N_EMBED ** 0.5)
    s = jnp.where(mask_bool[None, :, None, :], s, -jnp.inf)
    a = jax.nn.softmax(s, axis=-1)
    ctx = jnp.einsum("hbqk,hbkd->hbqd", a, v)          # [H, B, S, E]
    ctx = ctx.transpose(1, 2, 0, 3).reshape(B, S, N_HEADS * N_EMBED)
    y = _layer_norm(ctx @ p["wo_t"] + x)
    h = jnp.maximum(y @ p["w1_t"] + p["b1"][0], 0.0)
    return _layer_norm(h @ p["w2_t"] + p["b2"][0] + y)


# ---------------------------------------------------------------------------
def orthogonal(key, rows, cols):
    a = jax.random.normal(key, (max(rows, cols), min(rows, cols)), jnp.float32)
    q, _ = jnp.linalg.qr(a)
    q = q[:rows, :cols] if rows >= cols else q[:cols, :rows].T
    return q


def init_params(key):
    ks = jax.random.split(key, 6)
    he = N_HEADS * N_EMBED
    # PyTorch Linear weight is [out, in]; we store the transposed matrix [in, out].
    wq = orthogonal(ks[0], he, N_MODEL)
    wk = orthogonal(ks[1], he, N_MODEL)
    wv = orthogonal(ks[2], he, N_MODEL)
    wo = 0.05 * jax.random.normal(ks[3], (N_MODEL, he), jnp.float32)
    w1 = orthogonal(ks[4], N_INNER, N_MODEL)
    w2 = orthogonal(ks[5], N_MODEL, N_INNER)
    return {
        "wq_t": wq.T, "wk_t": wk.T, "wv_t": wv.T, "wo_t": wo.T,
        "w1_t": w1.T, "b1": jnp.zeros((1, N_INNER), jnp.float32),
        "w2_t": w2.T, "b2": jnp.zeros((1, N_MODEL), jnp.float32),
    }


if __name__ == "__main__":
    key = jax.random.PRNGKey(0)
    kx, kp = jax.random.split(key)
    x = jax.random.normal(kx, (B, S, N_MODEL), jnp.float32)
    mask = jnp.ones((B, S), dtype=bool).at[1, -2:].set(False)   # pad last 2 keys of batch 1
    params = init_params(kp)

    fused = jax.jit(transformer_layer)
    out = jax.block_until_ready(fused(x, mask, params))
    ref = jax.block_until_ready(reference(x, mask, params))

    assert out.shape == (B, S, N_MODEL)
    # approx=True softmax reciprocal -> slightly looser tolerance than 1e-4
    np.testing.assert_allclose(np.asarray(out), np.asarray(ref),
                               rtol=2e-3, atol=2e-3)
    print("KERNEL_OK")
</pallas_src>

<mosaic_0001>
module attributes {stable_mosaic.version = 11 : i64} {
  func.func @layer_kernel(%arg0: i32, %arg1: memref<1x8x32xf32, #tpu.memory_space<vmem>>, %arg2: memref<1x1x8xf32, #tpu.memory_space<vmem>>, %arg3: memref<12x32x8xf32, #tpu.memory_space<vmem>>, %arg4: memref<4x8x32xf32, #tpu.memory_space<vmem>>, %arg5: memref<32x64xf32, #tpu.memory_space<vmem>>, %arg6: memref<1x64xf32, #tpu.memory_space<vmem>>, %arg7: memref<64x32xf32, #tpu.memory_space<vmem>>, %arg8: memref<1x32xf32, #tpu.memory_space<vmem>>, %arg9: memref<1x8x32xf32, #tpu.memory_space<vmem>>) attributes {dimension_semantics = [#tpu.dimension_semantics<parallel>], iteration_bounds = array<i64: 2>, scalar_prefetch = 0 : i64, scratch_operands = 0 : i64, tpu.core_type = #tpu.core_type<tc>, window_params = [{transform_indices = @transform_0, window_bounds = array<i64: 1, 8, 32>}, {transform_indices = @transform_1, window_bounds = array<i64: 1, 1, 8>}, {pipeline_mode = #tpu.pipeline_mode<synchronous>, transform_indices = @transform_2, window_bounds = array<i64: 12, 32, 8>}, {pipeline_mode = #tpu.pipeline_mode<synchronous>, transform_indices = @transform_3, window_bounds = array<i64: 4, 8, 32>}, {pipeline_mode = #tpu.pipeline_mode<synchronous>, transform_indices = @transform_4, window_bounds = array<i64: 32, 64>}, {pipeline_mode = #tpu.pipeline_mode<synchronous>, transform_indices = @transform_5, window_bounds = array<i64: 1, 64>}, {pipeline_mode = #tpu.pipeline_mode<synchronous>, transform_indices = @transform_6, window_bounds = array<i64: 64, 32>}, {pipeline_mode = #tpu.pipeline_mode<synchronous>, transform_indices = @transform_7, window_bounds = array<i64: 1, 32>}, {transform_indices = @transform_8, window_bounds = array<i64: 1, 8, 32>}]} {
    %c0 = arith.constant 0 : index
    %c0_0 = arith.constant 0 : index
    %c0_1 = arith.constant 0 : index
    %0 = vector.load %arg1[%c0, %c0_0, %c0_1] : memref<1x8x32xf32, #tpu.memory_space<vmem>>, vector<1x8x32xf32>
    %1 = vector.shape_cast %0 : vector<1x8x32xf32> to vector<8x32xf32>
    %c0_2 = arith.constant 0 : index
    %c0_3 = arith.constant 0 : index
    %c0_4 = arith.constant 0 : index
    %2 = vector.load %arg2[%c0_2, %c0_3, %c0_4] : memref<1x1x8xf32, #tpu.memory_space<vmem>>, vector<1x1x8xf32>
    %3 = vector.shape_cast %1 : vector<8x32xf32> to vector<1x8x32xf32>
    %4 = vector.shape_cast %3 : vector<1x8x32xf32> to vector<1x8x32xf32>
    %5 = vector.broadcast %4 : vector<1x8x32xf32> to vector<12x8x32xf32>
    %c0_5 = arith.constant 0 : index
    %c0_6 = arith.constant 0 : index
    %c0_7 = arith.constant 0 : index
    %6 = vector.load %arg3[%c0_5, %c0_6, %c0_7] : memref<12x32x8xf32, #tpu.memory_space<vmem>>, vector<12x32x8xf32>
    "tpu.trace_start"() <{level = 10 : i32, message = "hsm,hme->hse"}> : () -> ()
    %cst = arith.constant dense<0.000000e+00> : vector<12x8x8xf32>
    %7 = tpu.matmul %5, %6, %cst {dimension_numbers = #tpu.dot_dimension_numbers<[2], [1], [1], [2], [0, 0, 0, 1, 1, 2], [0], [0]>} : vector<12x8x32xf32>, vector<12x32x8xf32>, vector<12x8x8xf32> -> vector<12x8x8xf32>
    "tpu.trace_stop"() : () -> ()
    %8 = vector.extract_strided_slice %7 {offsets = [0, 0, 0], sizes = [4, 8, 8], strides = [1, 1, 1]} : vector<12x8x8xf32> to vector<4x8x8xf32>
    %cst_8 = arith.constant 0.353553385 : f32
    %9 = vector.broadcast %cst_8 : f32 to vector<4x8x8xf32>
    %10 = arith.mulf %8, %9 : vector<4x8x8xf32>
    %11 = vector.extract_strided_slice %7 {offsets = [4, 0, 0], sizes = [4, 8, 8], strides = [1, 1, 1]} : vector<12x8x8xf32> to vector<4x8x8xf32>
    %12 = vector.extract_strided_slice %7 {offsets = [8, 0, 0], sizes = [4, 8, 8], strides = [1, 1, 1]} : vector<12x8x8xf32> to vector<4x8x8xf32>
    "tpu.trace_start"() <{level = 10 : i32, message = "hqe,hke->hqk"}> : () -> ()
    %cst_9 = arith.constant dense<0.000000e+00> : vector<4x8x8xf32>
    %13 = tpu.matmul %10, %11, %cst_9 {dimension_numbers = #tpu.dot_dimension_numbers<[2], [2], [1], [1], [0, 0, 0, 1, 1, 1], [0], [0]>} : vector<4x8x8xf32>, vector<4x8x8xf32>, vector<4x8x8xf32> -> vector<4x8x8xf32>
    "tpu.trace_stop"() : () -> ()
    %14 = vector.broadcast %2 : vector<1x1x8xf32> to vector<4x8x8xf32>
    %15 = arith.addf %13, %14 : vector<4x8x8xf32>
    %cst_10 = arith.constant dense<0xFF800000> : vector<4x8xf32>
    %16 = vector.multi_reduction <maximumf>, %15, %cst_10 [2] : vector<4x8x8xf32> to vector<4x8xf32>
    %17 = vector.shape_cast %16 : vector<4x8xf32> to vector<4x8x1xf32>
    %18 = vector.broadcast %17 : vector<4x8x1xf32> to vector<4x8x8xf32>
    %19 = arith.subf %15, %18 : vector<4x8x8xf32>
    %20 = math.exp %19 : vector<4x8x8xf32>
    %cst_11 = arith.constant dense<0.000000e+00> : vector<4x8xf32>
    %21 = vector.multi_reduction <add>, %20, %cst_11 [2] : vector<4x8x8xf32> to vector<4x8xf32>
    %22 = vector.shape_cast %21 : vector<4x8xf32> to vector<4x8x1xf32>
    %23 = tpu.reciprocal %22 {approx = true} : vector<4x8x1xf32> -> vector<4x8x1xf32>
    %24 = vector.broadcast %23 : vector<4x8x1xf32> to vector<4x8x8xf32>
    %25 = arith.mulf %20, %24 : vector<4x8x8xf32>
    "tpu.trace_start"() <{level = 10 : i32, message = "hqk,hke->hqe"}> : () -> ()
    %cst_12 = arith.constant dense<0.000000e+00> : vector<4x8x8xf32>
    %26 = tpu.matmul %25, %12, %cst_12 {dimension_numbers = #tpu.dot_dimension_numbers<[2], [1], [1], [2], [0, 0, 0, 1, 1, 2], [0], [0]>} : vector<4x8x8xf32>, vector<4x8x8xf32>, vector<4x8x8xf32> -> vector<4x8x8xf32>
    "tpu.trace_stop"() : () -> ()
    %c0_13 = arith.constant 0 : index
    %c0_14 = arith.constant 0 : index
    %c0_15 = arith.constant 0 : index
    %27 = vector.load %arg4[%c0_13, %c0_14, %c0_15] : memref<4x8x32xf32, #tpu.memory_space<vmem>>, vector<4x8x32xf32>
    "tpu.trace_start"() <{level = 10 : i32, message = "hse,hem->hsm"}> : () -> ()
    %cst_16 = arith.constant dense<0.000000e+00> : vector<4x8x32xf32>
    %28 = tpu.matmul %26, %27, %cst_16 {dimension_numbers = #tpu.dot_dimension_numbers<[2], [1], [1], [2], [0, 0, 0, 1, 1, 2], [0], [0]>} : vector<4x8x8xf32>, vector<4x8x32xf32>, vector<4x8x32xf32> -> vector<4x8x32xf32>
    "tpu.trace_stop"() : () -> ()
    %cst_17 = arith.constant dense<0.000000e+00> : vector<8x32xf32>
    %29 = vector.multi_reduction <add>, %28, %cst_17 [0] : vector<4x8x32xf32> to vector<8x32xf32>
    %30 = arith.addf %29, %1 : vector<8x32xf32>
    %cst_18 = arith.constant dense<0.000000e+00> : vector<8xf32>
    %31 = vector.multi_reduction <add>, %30, %cst_18 [1] : vector<8x32xf32> to vector<8xf32>
    %32 = vector.shape_cast %31 : vector<8xf32> to vector<8x1xf32>
    %cst_19 = arith.constant 3.200000e+01 : f32
    %33 = vector.broadcast %cst_19 : f32 to vector<8x1xf32>
    %34 = arith.divf %32, %33 : vector<8x1xf32>
    %35 = vector.broadcast %34 : vector<8x1xf32> to vector<8x32xf32>
    %36 = arith.subf %30, %35 : vector<8x32xf32>
    %37 = arith.mulf %36, %36 : vector<8x32xf32>
    %cst_20 = arith.constant dense<0.000000e+00> : vector<8xf32>
    %38 = vector.multi_reduction <add>, %37, %cst_20 [1] : vector<8x32xf32> to vector<8xf32>
    %39 = vector.shape_cast %38 : vector<8xf32> to vector<8x1xf32>
    %cst_21 = arith.constant 3.200000e+01 : f32
    %40 = vector.broadcast %cst_21 : f32 to vector<8x1xf32>
    %41 = arith.divf %39, %40 : vector<8x1xf32>
    %42 = vector.broadcast %34 : vector<8x1xf32> to vector<8x32xf32>
    %43 = arith.subf %30, %42 : vector<8x32xf32>
    %cst_22 = arith.constant 9.99999974E-6 : f32
    %44 = vector.broadcast %cst_22 : f32 to vector<8x1xf32>
    %45 = arith.addf %41, %44 : vector<8x1xf32>
    %46 = math.rsqrt %45 : vector<8x1xf32>
    %47 = vector.broadcast %46 : vector<8x1xf32> to vector<8x32xf32>
    %48 = arith.mulf %43, %47 : vector<8x32xf32>
    %c0_23 = arith.constant 0 : index
    %c0_24 = arith.constant 0 : index
    %49 = vector.load %arg5[%c0_23, %c0_24] : memref<32x64xf32, #tpu.memory_space<vmem>>, vector<32x64xf32>
    %cst_25 = arith.constant dense<0.000000e+00> : vector<8x64xf32>
    %50 = tpu.matmul %48, %49, %cst_25 {dimension_numbers = #tpu.dot_dimension_numbers<[1], [0], [0], [1], [0, 0, 1, 1], [], []>} : vector<8x32xf32>, vector<32x64xf32>, vector<8x64xf32> -> vector<8x64xf32>
    %c0_26 = arith.constant 0 : index
    %c0_27 = arith.constant 0 : index
    %51 = vector.load %arg6[%c0_26, %c0_27] : memref<1x64xf32, #tpu.memory_space<vmem>>, vector<1x64xf32>
    %52 = vector.broadcast %51 : vector<1x64xf32> to vector<8x64xf32>
    %53 = arith.addf %50, %52 : vector<8x64xf32>
    %cst_28 = arith.constant 0.000000e+00 : f32
    %54 = vector.broadcast %cst_28 : f32 to vector<8x64xf32>
    %55 = arith.maximumf %53, %54 : vector<8x64xf32>
    %c0_29 = arith.constant 0 : index
    %c0_30 = arith.constant 0 : index
    %56 = vector.load %arg7[%c0_29, %c0_30] : memref<64x32xf32, #tpu.memory_space<vmem>>, vector<64x32xf32>
    %cst_31 = arith.constant dense<0.000000e+00> : vector<8x32xf32>
    %57 = tpu.matmul %55, %56, %cst_31 {dimension_numbers = #tpu.dot_dimension_numbers<[1], [0], [0], [1], [0, 0, 1, 1], [], []>} : vector<8x64xf32>, vector<64x32xf32>, vector<8x32xf32> -> vector<8x32xf32>
    %c0_32 = arith.constant 0 : index
    %c0_33 = arith.constant 0 : index
    %58 = vector.load %arg8[%c0_32, %c0_33] : memref<1x32xf32, #tpu.memory_space<vmem>>, vector<1x32xf32>
    %59 = vector.broadcast %58 : vector<1x32xf32> to vector<8x32xf32>
    %60 = arith.addf %57, %59 : vector<8x32xf32>
    %61 = arith.addf %60, %48 : vector<8x32xf32>
    %cst_34 = arith.constant dense<0.000000e+00> : vector<8xf32>
    %62 = vector.multi_reduction <add>, %61, %cst_34 [1] : vector<8x32xf32> to vector<8xf32>
    %63 = vector.shape_cast %62 : vector<8xf32> to vector<8x1xf32>
    %cst_35 = arith.constant 3.200000e+01 : f32
    %64 = vector.broadcast %cst_35 : f32 to vector<8x1xf32>
    %65 = arith.divf %63, %64 : vector<8x1xf32>
    %66 = vector.broadcast %65 : vector<8x1xf32> to vector<8x32xf32>
    %67 = arith.subf %61, %66 : vector<8x32xf32>
    %68 = arith.mulf %67, %67 : vector<8x32xf32>
    %cst_36 = arith.constant dense<0.000000e+00> : vector<8xf32>
    %69 = vector.multi_reduction <add>, %68, %cst_36 [1] : vector<8x32xf32> to vector<8xf32>
    %70 = vector.shape_cast %69 : vector<8xf32> to vector<8x1xf32>
    %cst_37 = arith.constant 3.200000e+01 : f32
    %71 = vector.broadcast %cst_37 : f32 to vector<8x1xf32>
    %72 = arith.divf %70, %71 : vector<8x1xf32>
    %73 = vector.broadcast %65 : vector<8x1xf32> to vector<8x32xf32>
    %74 = arith.subf %61, %73 : vector<8x32xf32>
    %cst_38 = arith.constant 9.99999974E-6 : f32
    %75 = vector.broadcast %cst_38 : f32 to vector<8x1xf32>
    %76 = arith.addf %72, %75 : vector<8x1xf32>
    %77 = math.rsqrt %76 : vector<8x1xf32>
    %78 = vector.broadcast %77 : vector<8x1xf32> to vector<8x32xf32>
    %79 = arith.mulf %74, %78 : vector<8x32xf32>
    %c0_39 = arith.constant 0 : index
    %c0_40 = arith.constant 0 : index
    %c0_41 = arith.constant 0 : index
    %80 = vector.load %arg9[%c0_39, %c0_40, %c0_41] : memref<1x8x32xf32, #tpu.memory_space<vmem>>, vector<1x8x32xf32>
    %81 = vector.shape_cast %80 : vector<1x8x32xf32> to vector<8x32xf32>
    %82 = vector.shape_cast %79 : vector<8x32xf32> to vector<1x8x32xf32>
    tpu.vector_store %arg9[%c0_39, %c0_40, %c0_41], %82 {strides = array<i32>} : memref<1x8x32xf32, #tpu.memory_space<vmem>>, vector<1x8x32xf32>,
    return
  }
  func.func @transform_0(%arg0: i32) -> (i32, i32, i32) {
    %c0_i32 = arith.constant 0 : i32
    %c0_i32_0 = arith.constant 0 : i32
    %c0_i32_1 = arith.constant 0 : i32
    return %arg0, %c0_i32, %c0_i32_0 : i32, i32, i32
  }
  func.func @transform_1(%arg0: i32) -> (i32, i32, i32) {
    %c0_i32 = arith.constant 0 : i32
    %c0_i32_0 = arith.constant 0 : i32
    %c0_i32_1 = arith.constant 0 : i32
    return %arg0, %c0_i32, %c0_i32_0 : i32, i32, i32
  }
  func.func @transform_2(%arg0: i32) -> (i32, i32, i32) {
    %c0_i32 = arith.constant 0 : i32
    %c0_i32_0 = arith.constant 0 : i32
    %c0_i32_1 = arith.constant 0 : i32
    %c0_i32_2 = arith.constant 0 : i32
    return %c0_i32, %c0_i32_0, %c0_i32_1 : i32, i32, i32
  }
  func.func @transform_3(%arg0: i32) -> (i32, i32, i32) {
    %c0_i32 = arith.constant 0 : i32
    %c0_i32_0 = arith.constant 0 : i32
    %c0_i32_1 = arith.constant 0 : i32
    %c0_i32_2 = arith.constant 0 : i32
    return %c0_i32, %c0_i32_0, %c0_i32_1 : i32, i32, i32
  }
  func.func @transform_4(%arg0: i32) -> (i32, i32) {
    %c0_i32 = arith.constant 0 : i32
    %c0_i32_0 = arith.constant 0 : i32
    %c0_i32_1 = arith.constant 0 : i32
    return %c0_i32, %c0_i32_0 : i32, i32
  }
  func.func @transform_5(%arg0: i32) -> (i32, i32) {
    %c0_i32 = arith.constant 0 : i32
    %c0_i32_0 = arith.constant 0 : i32
    %c0_i32_1 = arith.constant 0 : i32
    return %c0_i32, %c0_i32_0 : i32, i32
  }
  func.func @transform_6(%arg0: i32) -> (i32, i32) {
    %c0_i32 = arith.constant 0 : i32
    %c0_i32_0 = arith.constant 0 : i32
    %c0_i32_1 = arith.constant 0 : i32
    return %c0_i32, %c0_i32_0 : i32, i32
  }
  func.func @transform_7(%arg0: i32) -> (i32, i32) {
    %c0_i32 = arith.constant 0 : i32
    %c0_i32_0 = arith.constant 0 : i32
    %c0_i32_1 = arith.constant 0 : i32
    return %c0_i32, %c0_i32_0 : i32, i32
  }
  func.func @transform_8(%arg0: i32) -> (i32, i32, i32) {
    %c0_i32 = arith.constant 0 : i32
    %c0_i32_0 = arith.constant 0 : i32
    %c0_i32_1 = arith.constant 0 : i32
    return %arg0, %c0_i32, %c0_i32_0 : i32, i32, i32
  }
}

</mosaic_0001>

<llo_original>
// kernel: transformer_layer.1
$region0: #{transformer_layer.1}
  #allocation0 [shape = 'u32[]', space=smem, size = 0x4, offset = 0x4, fixed_abs, tag = 'smem constant byte address 0x4 - core index']
  #allocation1 [shape = 'u32[144,128]{1,0:T(1,128)}', space=vmem, size = 0x12000, scoped, tag = 'internal scratch']
  %s0 = inlined_call_operand.vmem [shape: f32[2,8,32], index: 0, kind: input, shape index: {}]
  %s1 = inlined_call_operand.vmem [shape: f32[2,1,8], index: 1, kind: input, shape index: {}]
  %s2 = inlined_call_operand.vmem [shape: f32[12,32,8], index: 2, kind: input, shape index: {}]
  %s3 = inlined_call_operand.vmem [shape: f32[4,8,32], index: 3, kind: input, shape index: {}]
  %s4 = inlined_call_operand.vmem [shape: f32[32,64], index: 4, kind: input, shape index: {}]
  %s5 = inlined_call_operand.vmem [shape: f32[1,64], index: 5, kind: input, shape index: {}]
  %s6 = inlined_call_operand.vmem [shape: f32[64,32], index: 6, kind: input, shape index: {}]
  %s7 = inlined_call_operand.vmem [shape: f32[1,32], index: 7, kind: input, shape index: {}]
  %s8 = inlined_call_operand.hbm [shape: f32[2,8,32], index: 8, kind: output, shape index: {}]
  %s9 = sld [smem:[#allocation0]]
  $region65: #{transformer_layer.1} parent=0
    _
  %s11 = ssub.s32 1, %s9
  %s12 = scalar_select 0, %s11, %s9
  $region1: #{transformer_layer.1} parent=0
    #allocation2 [shape = 'u8[8192]{0}', space=vmem, size = 0x2000, scoped, tag = 'output window, operand 0']
    #allocation3 [shape = 's32[2]{0}', space=sflag, size = 0x8, scoped, tag = 'scoped memory for transformer_layer.1']
    %13 = vsyncpa [#allocation3], 0
    %s14 = scalar_lea.sflag [#allocation3], 1
    %15 = vsyncpa %s14, 0
    loop: start=0, step=1, limit=4
    $region2: #{transformer_layer.1} parent=1 // loop_pre_header
      _
    $region3: #{transformer_layer.1} parent=1 // loop_header
      %s17 = sphi 0, %s21
      %p18 = scmp.ge.s32.totalorder %s17, 4
      %s27 = sphi 0, %s29
      %s30 = sphi 0, %s27
      %s31 = sphi 0, %s30
      %s47 = sphi 0, %s31
      %s53 = sphi 0, %s55
      %s56 = sphi 0, %s53
      %s57 = sphi 0, %s56
      %s73 = sphi 0, %s57
      %s77 = sphi 0, %s77
      %s79 = sphi 0, %s77
      %s80 = sphi 0, %s79
      %s94 = sphi 0, %s80
      %s98 = sphi 0, %s98
      %s100 = sphi 0, %s98
      %s101 = sphi 0, %s100
      %s115 = sphi 0, %s101
      %s119 = sphi 0, %s119
      %s121 = sphi 0, %s119
      %s122 = sphi 0, %s121
      %s136 = sphi 0, %s122
      %s140 = sphi 0, %s140
      %s142 = sphi 0, %s140
      %s143 = sphi 0, %s142
      %s157 = sphi 0, %s143
      %s161 = sphi 0, %s161
      %s163 = sphi 0, %s161
      %s164 = sphi 0, %s163
      %s178 = sphi 0, %s164
      %s182 = sphi 0, %s182
      %s184 = sphi 0, %s182
      %s185 = sphi 0, %s184
      %s199 = sphi 0, %s185
      %s205 = sphi 0, %s207
      %s208 = sphi 0, %s205
      %s209 = sphi 0, %s208
      %s225 = sphi 0, %s209
    $region4: #{transformer_layer.1} parent=1 // loop_header_branch
      %20 = sbr.rel (%p18) target = $region8
    $region5: #{transformer_layer.1} parent=1 // loop_body
      %s22 = ssub.s32 %s17, 1
      %s23 = ssub.s32 %s17, 2
      %s24 = sadd.s32 %s17, 1
      %s25 = ssub.s32 %s17, %s24
      %p26 = scmp.eq.s32.totalorder %s25, 0
      %s28 = sadd.s32 %s27, 1
      %s29 = scalar_select %p26, %s27, %s28
      %p32 = pneg %p26
      %p33 = scmp.eq.s32.totalorder %s17, 1
      %p34 = por %p32, %p33
      %p35 = scmp.ne.s32.totalorder %s27, %s30
      %p36 = scmp.eq.s32.totalorder %s17, 0
      %p37 = por %p35, %p36
      %p38 = scmp.ne.s32.totalorder %s27, %s30
      %p39 = scmp.eq.s32.totalorder %s22, 1
      %p40 = por %p38, %p39
      %p41 = scmp.ne.s32.totalorder %s30, %s31
      %p42 = scmp.eq.s32.totalorder %s22, 0
      %p43 = por %p41, %p42
      %p44 = scmp.ne.s32.totalorder %s30, %s31
      %p45 = scmp.eq.s32.totalorder %s23, 1
      %p46 = por %p44, %p45
      %p48 = scmp.ne.s32.totalorder %s31, %s47
      %p49 = scmp.eq.s32.totalorder %s23, 0
      %p50 = por %p48, %p49
      %s51 = ssub.s32 %s17, %s24
      %p52 = scmp.eq.s32.totalorder %s51, 0
      %s54 = sadd.s32 %s53, 1
      %s55 = scalar_select %p52, %s53, %s54
      %p58 = pneg %p52
      %p59 = scmp.eq.s32.totalorder %s17, 1
      %p60 = por %p58, %p59
      %p61 = scmp.ne.s32.totalorder %s53, %s56
      %p62 = scmp.eq.s32.totalorder %s17, 0
      %p63 = por %p61, %p62
      %p64 = scmp.ne.s32.totalorder %s53, %s56
      %p65 = scmp.eq.s32.totalorder %s22, 1
      %p66 = por %p64, %p65
      %p67 = scmp.ne.s32.totalorder %s56, %s57
      %p68 = scmp.eq.s32.totalorder %s22, 0
      %p69 = por %p67, %p68
      %p70 = scmp.ne.s32.totalorder %s56, %s57
      %p71 = scmp.eq.s32.totalorder %s23, 1
      %p72 = por %p70, %p71
      %p74 = scmp.ne.s32.totalorder %s57, %s73
      %p75 = scmp.eq.s32.totalorder %s23, 0
      %p76 = por %p74, %p75
      %s78 = sadd.s32 %s77, 1
      %p81 = scmp.eq.s32.totalorder %s17, 1
      %p82 = scmp.ne.s32.totalorder %s77, %s79
      %p83 = scmp.eq.s32.totalorder %s17, 0
      %p84 = por %p82, %p83
      %p85 = scmp.ne.s32.totalorder %s77, %s79
      %p86 = scmp.eq.s32.totalorder %s22, 1
      %p87 = por %p85, %p86
      %p88 = scmp.ne.s32.totalorder %s79, %s80
      %p89 = scmp.eq.s32.totalorder %s22, 0
      %p90 = por %p88, %p89
      %p91 = scmp.ne.s32.totalorder %s79, %s80
      %p92 = scmp.eq.s32.totalorder %s23, 1
      %p93 = por %p91, %p92
      %p95 = scmp.ne.s32.totalorder %s80, %s94
      %p96 = scmp.eq.s32.totalorder %s23, 0
      %p97 = por %p95, %p96
      %s99 = sadd.s32 %s98, 1
      %p102 = scmp.eq.s32.totalorder %s17, 1
      %p103 = scmp.ne.s32.totalorder %s98, %s100
      %p104 = scmp.eq.s32.totalorder %s17, 0
      %p105 = por %p103, %p104
      %p106 = scmp.ne.s32.totalorder %s98, %s100
      %p107 = scmp.eq.s32.totalorder %s22, 1
      %p108 = por %p106, %p107
      %p109 = scmp.ne.s32.totalorder %s100, %s101
      %p110 = scmp.eq.s32.totalorder %s22, 0
      %p111 = por %p109, %p110
      %p112 = scmp.ne.s32.totalorder %s100, %s101
      %p113 = scmp.eq.s32.totalorder %s23, 1
      %p114 = por %p112, %p113
      %p116 = scmp.ne.s32.totalorder %s101, %s115
      %p117 = scmp.eq.s32.totalorder %s23, 0
      %p118 = por %p116, %p117
      %s120 = sadd.s32 %s119, 1
      %p123 = scmp.eq.s32.totalorder %s17, 1
      %p124 = scmp.ne.s32.totalorder %s119, %s121
      %p125 = scmp.eq.s32.totalorder %s17, 0
      %p126 = por %p124, %p125
      %p127 = scmp.ne.s32.totalorder %s119, %s121
      %p128 = scmp.eq.s32.totalorder %s22, 1
      %p129 = por %p127, %p128
      %p130 = scmp.ne.s32.totalorder %s121, %s122
      %p131 = scmp.eq.s32.totalorder %s22, 0
      %p132 = por %p130, %p131
      %p133 = scmp.ne.s32.totalorder %s121, %s122
      %p134 = scmp.eq.s32.totalorder %s23, 1
      %p135 = por %p133, %p134
      %p137 = scmp.ne.s32.totalorder %s122, %s136
      %p138 = scmp.eq.s32.totalorder %s23, 0
      %p139 = por %p137, %p138
      %s141 = sadd.s32 %s140, 1
      %p144 = scmp.eq.s32.totalorder %s17, 1
      %p145 = scmp.ne.s32.totalorder %s140, %s142
      %p146 = scmp.eq.s32.totalorder %s17, 0
      %p147 = por %p145, %p146
      %p148 = scmp.ne.s32.totalorder %s140, %s142
      %p149 = scmp.eq.s32.totalorder %s22, 1
      %p150 = por %p148, %p149
      %p151 = scmp.ne.s32.totalorder %s142, %s143
      %p152 = scmp.eq.s32.totalorder %s22, 0
      %p153 = por %p151, %p152
      %p154 = scmp.ne.s32.totalorder %s142, %s143
      %p155 = scmp.eq.s32.totalorder %s23, 1
      %p156 = por %p154, %p155
      %p158 = scmp.ne.s32.totalorder %s143, %s157
      %p159 = scmp.eq.s32.totalorder %s23, 0
      %p160 = por %p158, %p159
      %s162 = sadd.s32 %s161, 1
      %p165 = scmp.eq.s32.totalorder %s17, 1
      %p166 = scmp.ne.s32.totalorder %s161, %s163
      %p167 = scmp.eq.s32.totalorder %s17, 0
      %p168 = por %p166, %p167
      %p169 = scmp.ne.s32.totalorder %s161, %s163
      %p170 = scmp.eq.s32.totalorder %s22, 1
      %p171 = por %p169, %p170
      %p172 = scmp.ne.s32.totalorder %s163, %s164
      %p173 = scmp.eq.s32.totalorder %s22, 0
      %p174 = por %p172, %p173
      %p175 = scmp.ne.s32.totalorder %s163, %s164
      %p176 = scmp.eq.s32.totalorder %s23, 1
      %p177 = por %p175, %p176
      %p179 = scmp.ne.s32.totalorder %s164, %s178
      %p180 = scmp.eq.s32.totalorder %s23, 0
      %p181 = por %p179, %p180
      %s183 = sadd.s32 %s182, 1
      %p186 = scmp.eq.s32.totalorder %s17, 1
      %p187 = scmp.ne.s32.totalorder %s182, %s184
      %p188 = scmp.eq.s32.totalorder %s17, 0
      %p189 = por %p187, %p188
      %p190 = scmp.ne.s32.totalorder %s182, %s184
      %p191 = scmp.eq.s32.totalorder %s22, 1
      %p192 = por %p190, %p191
      %p193 = scmp.ne.s32.totalorder %s184, %s185
      %p194 = scmp.eq.s32.totalorder %s22, 0
      %p195 = por %p193, %p194
      %p196 = scmp.ne.s32.totalorder %s184, %s185
      %p197 = scmp.eq.s32.totalorder %s23, 1
      %p198 = por %p196, %p197
      %p200 = scmp.ne.s32.totalorder %s185, %s199
      %p201 = scmp.eq.s32.totalorder %s23, 0
      %p202 = por %p200, %p201
      %s203 = ssub.s32 %s17, %s24
      %p204 = scmp.eq.s32.totalorder %s203, 0
      %s206 = sadd.s32 %s205, 1
      %s207 = scalar_select %p204, %s205, %s206
      %p210 = pneg %p204
      %p211 = scmp.eq.s32.totalorder %s17, 1
      %p212 = por %p210, %p211
      %p213 = scmp.ne.s32.totalorder %s205, %s208
      %p214 = scmp.eq.s32.totalorder %s17, 0
      %p215 = por %p213, %p214
      %p216 = scmp.ne.s32.totalorder %s205, %s208
      %p217 = scmp.eq.s32.totalorder %s22, 1
      %p218 = por %p216, %p217
      %p219 = scmp.ne.s32.totalorder %s208, %s209
      %p220 = scmp.eq.s32.totalorder %s22, 0
      %p221 = por %p219, %p220
      %p222 = scmp.ne.s32.totalorder %s208, %s209
      %p223 = scmp.eq.s32.totalorder %s23, 1
      %p224 = por %p222, %p223
      %p226 = scmp.ne.s32.totalorder %s209, %s225
      %p227 = scmp.eq.s32.totalorder %s23, 0
      %p228 = por %p226, %p227
      %p229 = scmp.le.s32.totalorder 1, %s17
      %p230 = scmp.lt.s32.totalorder %s17, 3
      %p231 = pnand %p229, %p230
      %p232 = pneg %p231
      // Predicated region
      $region9: #{transformer_layer.1} parent=5 // pred_check
        _
      $region10: #{transformer_layer.1} parent=5 // pred_check_branch
        %234 = sbr.rel (%p231) target = $region12
      $region11: #{transformer_layer.1} parent=5 // pred_region
        %s235 = ssub.s32 %s17, 1
        // Predicated region
        $region13: #{transformer_layer.1} parent=11 // pred_check
          %p236 = pneg %p90
        $region14: #{transformer_layer.1} parent=11 // pred_check_branch
          %238 = sbr.rel (%p236) target = $region16
        $region15: #{transformer_layer.1} parent=11 // pred_region
          _
        $region16: #{transformer_layer.1} parent=11 // pred_fallthru
          _
        // Predicated region
        $region17: #{transformer_layer.1} parent=11 // pred_check
          %p239 = pneg %p111
        $region18: #{transformer_layer.1} parent=11 // pred_check_branch
          %241 = sbr.rel (%p239) target = $region20
        $region19: #{transformer_layer.1} parent=11 // pred_region
          _
        $region20: #{transformer_layer.1} parent=11 // pred_fallthru
          _
        // Predicated region
        $region21: #{transformer_layer.1} parent=11 // pred_check
          %p242 = pneg %p132
        $region22: #{transformer_layer.1} parent=11 // pred_check_branch
          %244 = sbr.rel (%p242) target = $region24
        $region23: #{transformer_layer.1} parent=11 // pred_region
          _
        $region24: #{transformer_layer.1} parent=11 // pred_fallthru
          _
        // Predicated region
        $region25: #{transformer_layer.1} parent=11 // pred_check
          %p245 = pneg %p153
        $region26: #{transformer_layer.1} parent=11 // pred_check_branch
          %247 = sbr.rel (%p245) target = $region28
        $region27: #{transformer_layer.1} parent=11 // pred_region
          _
        $region28: #{transformer_layer.1} parent=11 // pred_fallthru
          _
        // Predicated region
        $region29: #{transformer_layer.1} parent=11 // pred_check
          %p248 = pneg %p174
        $region30: #{transformer_layer.1} parent=11 // pred_check_branch
          %250 = sbr.rel (%p248) target = $region32
        $region31: #{transformer_layer.1} parent=11 // pred_region
          _
        $region32: #{transformer_layer.1} parent=11 // pred_fallthru
          _
        // Predicated region
        $region33: #{transformer_layer.1} parent=11 // pred_check
          %p251 = pneg %p195
        $region34: #{transformer_layer.1} parent=11 // pred_check_branch
          %253 = sbr.rel (%p251) target = $region36
        $region35: #{transformer_layer.1} parent=11 // pred_region
          _
        $region36: #{transformer_layer.1} parent=11 // pred_fallthru
          _
      $region12: #{transformer_layer.1} parent=5 // pred_fallthru
        _
      %p254 = scmp.lt.s32.totalorder %s17, 2
      // Predicated region
      $region37: #{transformer_layer.1} parent=5 // pred_check
        %p255 = pneg %p254
      $region38: #{transformer_layer.1} parent=5 // pred_check_branch
        %257 = sbr.rel (%p255) target = $region40
      $region39: #{transformer_layer.1} parent=5 // pred_region
        // Predicated region
        $region41: #{transformer_layer.1} parent=39 // pred_check
          %p258 = pneg %p37
        $region42: #{transformer_layer.1} parent=39 // pred_check_branch
          %260 = sbr.rel (%p258) target = $region44
        $region43: #{transformer_layer.1} parent=39 // pred_region
          %p261 = scmp.lt.s32.totalorder %s17, 1
          %s262 = scalar_select %p261, %s17, 1
          %s263 = smul.addr %s262, 8
          %s264 = scalar_lea.vmem %s0, %s263
        $region44: #{transformer_layer.1} parent=39 // pred_fallthru
          _
        // Predicated region
        $region45: #{transformer_layer.1} parent=39 // pred_check
          %p265 = pneg %p63
        $region46: #{transformer_layer.1} parent=39 // pred_check_branch
          %267 = sbr.rel (%p265) target = $region48
        $region47: #{transformer_layer.1} parent=39 // pred_region
          %p268 = scmp.lt.s32.totalorder %s17, 1
          %s269 = scalar_select %p268, %s17, 1
          %s270 = scalar_lea.vmem %s1, %s269
        $region48: #{transformer_layer.1} parent=39 // pred_fallthru
          _
      $region40: #{transformer_layer.1} parent=5 // pred_fallthru
        _
      %p271 = scmp.le.s32.totalorder 1, %s17
      %p272 = scmp.lt.s32.totalorder %s17, 3
      %p273 = pnand %p271, %p272
      %p274 = pneg %p273
      // Predicated region
      $region49: #{transformer_layer.1} parent=5 // pred_check
        _
      $region50: #{transformer_layer.1} parent=5 // pred_check_branch
        %276 = sbr.rel (%p273) target = $region52
      $region51: #{transformer_layer.1} parent=5 // pred_region
        %s277 = ssub.s32 %s17, 1
        %p278 = scmp.lt.s32.totalorder %s22, 1
        %s279 = scalar_select %p278, %s22, 1
        %s280 = smul.addr %s279, 8
        %s281 = scalar_lea.vmem %s0, %s280
        %p282 = pneg %p43
        %p283 = pneg %p40
        %p284 = scmp.lt.s32.totalorder %s22, 1
        %s285 = scalar_select %p284, %s22, 1
        %s286 = scalar_lea.vmem %s1, %s285
        %p287 = pneg %p69
        %p288 = pneg %p66
        %p289 = pneg %p90
        %p290 = pneg %p87
        %p291 = pneg %p111
        %p292 = pneg %p108
        %p293 = pneg %p132
        %p294 = pneg %p129
        %p295 = pneg %p153
        %p296 = pneg %p150
        %p297 = pneg %p174
        %p298 = pneg %p171
        %p299 = pneg %p195
        %p300 = pneg %p192
        %p301 = pneg %p221
        %p302 = pneg %p218
        %s303 = sand.u32 %s208, 1
        %s304 = scalar_lea.sflag [#allocation3], %s303
        %s305 = sand.u32 %s208, 1
        %s306 = smul.addr %s305, 8
        %s307 = scalar_lea.vmem [#allocation2], %s306
        %p308 = scmp.lt.s32.totalorder %s22, 1
        %s309 = scalar_select %p308, %s22, 1
        %s310 = smul.addr %s309, 8
        %s311 = scalar_lea.vmem %s0, %s310
        %p312 = scmp.lt.s32.totalorder %s22, 1
        %s313 = scalar_select %p312, %s22, 1
        %s314 = scalar_lea.vmem %s1, %s313
        %v315 = vld [vmem:[%s311] sm:$0xff]
        %v316 = vld [vmem:[%s314] sm:$0x1]
        %v317 = vld [vmem:[%s2] sm:$0xff]
        %v318 = vld [vmem:[%s2 + $0x8] sm:$0xff]
        %v319 = vld [vmem:[%s2 + $0x10] sm:$0xff]
        %v320 = vld [vmem:[%s2 + $0x18] sm:$0xff]
        %v321 = vld [vmem:[%s2 + $0x20] sm:$0xff]
        %v322 = vld [vmem:[%s2 + $0x28] sm:$0xff]
        %v323 = vld [vmem:[%s2 + $0x30] sm:$0xff]
        %v324 = vld [vmem:[%s2 + $0x38] sm:$0xff]
        %v325 = vld [vmem:[%s2 + $0x40] sm:$0xff]
        %v326 = vld [vmem:[%s2 + $0x48] sm:$0xff]
        %v327 = vld [vmem:[%s2 + $0x50] sm:$0xff]
        %v328 = vld [vmem:[%s2 + $0x58] sm:$0xff]
        %v329 = vld [vmem:[%s2 + $0x60] sm:$0xff]
        %v330 = vld [vmem:[%s2 + $0x68] sm:$0xff]
        %v331 = vld [vmem:[%s2 + $0x70] sm:$0xff]
        %v332 = vld [vmem:[%s2 + $0x78] sm:$0xff]
        %v333 = vld [vmem:[%s2 + $0x80] sm:$0xff]
        %v334 = vld [vmem:[%s2 + $0x88] sm:$0xff]
        %v335 = vld [vmem:[%s2 + $0x90] sm:$0xff]
        %v336 = vld [vmem:[%s2 + $0x98] sm:$0xff]
        %v337 = vld [vmem:[%s2 + $0xa0] sm:$0xff]
        %v338 = vld [vmem:[%s2 + $0xa8] sm:$0xff]
        %v339 = vld [vmem:[%s2 + $0xb0] sm:$0xff]
        %v340 = vld [vmem:[%s2 + $0xb8] sm:$0xff]
        %v341 = vld [vmem:[%s2 + $0xc0] sm:$0xff]
        %v342 = vld [vmem:[%s2 + $0xc8] sm:$0xff]
        %v343 = vld [vmem:[%s2 + $0xd0] sm:$0xff]
        %v344 = vld [vmem:[%s2 + $0xd8] sm:$0xff]
        %v345 = vld [vmem:[%s2 + $0xe0] sm:$0xff]
        %v346 = vld [vmem:[%s2 + $0xe8] sm:$0xff]
        %v347 = vld [vmem:[%s2 + $0xf0] sm:$0xff]
        %v348 = vld [vmem:[%s2 + $0xf8] sm:$0xff]
        %v349 = vld [vmem:[%s2 + $0x100] sm:$0xff]
        %v350 = vld [vmem:[%s2 + $0x108] sm:$0xff]
        %v351 = vld [vmem:[%s2 + $0x110] sm:$0xff]
        %v352 = vld [vmem:[%s2 + $0x118] sm:$0xff]
        %v353 = vld [vmem:[%s2 + $0x120] sm:$0xff]
        %v354 = vld [vmem:[%s2 + $0x128] sm:$0xff]
        %v355 = vld [vmem:[%s2 + $0x130] sm:$0xff]
        %v356 = vld [vmem:[%s2 + $0x138] sm:$0xff]
        %v357 = vld [vmem:[%s2 + $0x140] sm:$0xff]
        %v358 = vld [vmem:[%s2 + $0x148] sm:$0xff]
        %v359 = vld [vmem:[%s2 + $0x150] sm:$0xff]
        %v360 = vld [vmem:[%s2 + $0x158] sm:$0xff]
        %v361 = vld [vmem:[%s2 + $0x160] sm:$0xff]
        %v362 = vld [vmem:[%s2 + $0x168] sm:$0xff]
        %v363 = vld [vmem:[%s2 + $0x170] sm:$0xff]
        %v364 = vld [vmem:[%s2 + $0x178] sm:$0xff]
        %vm365 = vcmask 261120
        %v367 = vsel %vm365, %v315, 0
        %369 = vmatprep.subr.mxu0 0.0
        %370 = vmatpush1.msra.mxu0 %v317
        %371 = vmatprep.subr.mxu0 0.0
        %372 = vmatpush1.msra.mxu0 %v318
        %373 = vmatprep.subr.mxu0 0.0
        %374 = vmatpush1.msra.mxu0 %v319
        %375 = vmatprep.subr.mxu0 0.0
        %376 = vmatpush1.msra.mxu0 %v320
        %377 = vmatprep.subr.mxu0 0.0
        %378 = vmatpush1.msra.mxu0 0.0
        %379 = vmatprep.subr.mxu0 0.0
        %380 = vmatpush1.msra.mxu0 0.0
        %381 = vmatprep.subr.mxu0 0.0
        %382 = vmatpush1.msra.mxu0 0.0
        %383 = vmatprep.subr.mxu0 0.0
        %384 = vmatpush1.msra.mxu0 0.0
        %385 = vmatprep.subr.mxu0 0.0
        %386 = vmatpush1.msra.mxu0 0.0
        %387 = vmatprep.subr.mxu0 0.0
        %388 = vmatpush1.msra.mxu0 0.0
        %389 = vmatprep.subr.mxu0 0.0
        %390 = vmatpush1.msra.mxu0 0.0
        %391 = vmatprep.subr.mxu0 0.0
        %392 = vmatpush1.msra.mxu0 0.0
        %393 = vmatprep.subr.mxu0 0.0
        %394 = vmatpush1.msra.mxu0 0.0
        %395 = vmatprep.subr.mxu0 0.0
        %396 = vmatpush1.msra.mxu0 0.0
        %397 = vmatprep.subr.mxu0 0.0
        %398 = vmatpush1.msra.mxu0 0.0
        %399 = vmatprep.subr.mxu0 0.0
        %400 = vmatpush1.msra.mxu0 0.0
        %401 = vmatprep.subr.mxu0 0.0
        %402 = vmatpush1.msra.mxu0 0.0
        %403 = vmatprep.subr.mxu0 0.0
        %404 = vmatpush1.msra.mxu0 0.0
        %405 = vmatprep.subr.mxu0 0.0
        %406 = vmatpush1.msra.mxu0 0.0
        %407 = vmatprep.subr.mxu0 0.0
        %408 = vmatpush1.msra.mxu0 0.0
        %409 = vmatprep.subr.mxu0 0.0
        %410 = vmatpush1.msra.mxu0 0.0
        %411 = vmatprep.subr.mxu0 0.0
        %412 = vmatpush1.msra.mxu0 0.0
        %413 = vmatprep.subr.mxu0 0.0
        %414 = vmatpush1.msra.mxu0 0.0
        %415 = vmatprep.subr.mxu0 0.0
        %416 = vmatpush1.msra.mxu0 0.0
        %417 = vmatprep.subr.mxu0 0.0
        %418 = vmatpush1.msra.mxu0 0.0
        %419 = vmatprep.subr.mxu0 0.0
        %420 = vmatpush1.msra.mxu0 0.0
        %421 = vmatprep.subr.mxu0 0.0
        %422 = vmatpush1.msra.mxu0 0.0
        %423 = vmatprep.subr.mxu0 0.0
        %424 = vmatpush1.msra.mxu0 0.0
        %425 = vmatprep.subr.mxu0 0.0
        %426 = vmatpush1.msra.mxu0 0.0
        %427 = vmatprep.subr.mxu0 0.0
        %428 = vmatpush1.msra.mxu0 0.0
        %429 = vmatprep.subr.mxu0 0.0
        %430 = vmatpush1.msra.mxu0 0.0
        %431 = vmatprep.subr.mxu0 0.0
        %432 = vmatpush1.msra.mxu0 0.0
        %433 = vmatprep.mubr.f32.mxu0 0.0
        %434 = vmatmul.mubr.f32.gmra.mrb[0].mxu0 %v367
        %v435 = vpop.f32.mrb[0].mxu0
        %v436 = vadd.f32 0.0, %v435
        %v437 = vpop.f32.mrb[0].mxu0
        %438 = vdwg.mxu0
        %439 = vmatprep.subr.mxu0 0.0
        %440 = vmatpush1.msra.mxu0 %v321
        %441 = vmatprep.subr.mxu0 0.0
        %442 = vmatpush1.msra.mxu0 %v322
        %443 = vmatprep.subr.mxu0 0.0
        %444 = vmatpush1.msra.mxu0 %v323
        %445 = vmatprep.subr.mxu0 0.0
        %446 = vmatpush1.msra.mxu0 %v324
        %447 = vmatprep.subr.mxu0 0.0
        %448 = vmatpush1.msra.mxu0 0.0
        %449 = vmatprep.subr.mxu0 0.0
        %450 = vmatpush1.msra.mxu0 0.0
        %451 = vmatprep.subr.mxu0 0.0
        %452 = vmatpush1.msra.mxu0 0.0
        %453 = vmatprep.subr.mxu0 0.0
        %454 = vmatpush1.msra.mxu0 0.0
        %455 = vmatprep.subr.mxu0 0.0
        %456 = vmatpush1.msra.mxu0 0.0
        %457 = vmatprep.subr.mxu0 0.0
        %458 = vmatpush1.msra.mxu0 0.0
        %459 = vmatprep.subr.mxu0 0.0
        %460 = vmatpush1.msra.mxu0 0.0
        %461 = vmatprep.subr.mxu0 0.0
        %462 = vmatpush1.msra.mxu0 0.0
        %463 = vmatprep.subr.mxu0 0.0
        %464 = vmatpush1.msra.mxu0 0.0
        %465 = vmatprep.subr.mxu0 0.0
        %466 = vmatpush1.msra.mxu0 0.0
        %467 = vmatprep.subr.mxu0 0.0
        %468 = vmatpush1.msra.mxu0 0.0
        %469 = vmatprep.subr.mxu0 0.0
        %470 = vmatpush1.msra.mxu0 0.0
        %471 = vmatprep.subr.mxu0 0.0
        %472 = vmatpush1.msra.mxu0 0.0
        %473 = vmatprep.subr.mxu0 0.0
        %474 = vmatpush1.msra.mxu0 0.0
        %475 = vmatprep.subr.mxu0 0.0
        %476 = vmatpush1.msra.mxu0 0.0
        %477 = vmatprep.subr.mxu0 0.0
        %478 = vmatpush1.msra.mxu0 0.0
        %479 = vmatprep.subr.mxu0 0.0
        %480 = vmatpush1.msra.mxu0 0.0
        %481 = vmatprep.subr.mxu0 0.0
        %482 = vmatpush1.msra.mxu0 0.0
        %483 = vmatprep.subr.mxu0 0.0
        %484 = vmatpush1.msra.mxu0 0.0
        %485 = vmatprep.subr.mxu0 0.0
        %486 = vmatpush1.msra.mxu0 0.0
        %487 = vmatprep.subr.mxu0 0.0
        %488 = vmatpush1.msra.mxu0 0.0
        %489 = vmatprep.subr.mxu0 0.0
        %490 = vmatpush1.msra.mxu0 0.0
        %491 = vmatprep.subr.mxu0 0.0
        %492 = vmatpush1.msra.mxu0 0.0
        %493 = vmatprep.subr.mxu0 0.0
        %494 = vmatpush1.msra.mxu0 0.0
        %495 = vmatprep.subr.mxu0 0.0
        %496 = vmatpush1.msra.mxu0 0.0
        %497 = vmatprep.subr.mxu0 0.0
        %498 = vmatpush1.msra.mxu0 0.0
        %499 = vmatprep.subr.mxu0 0.0
        %500 = vmatpush1.msra.mxu0 0.0
        %501 = vmatprep.subr.mxu0 0.0
        %502 = vmatpush1.msra.mxu0 0.0
        %503 = vmatprep.mubr.f32.mxu0 0.0
        %504 = vmatmul.mubr.f32.gmra.mrb[0].mxu0 %v367
        %v505 = vpop.f32.mrb[0].mxu0
        %v506 = vadd.f32 0.0, %v505
        %v507 = vpop.f32.mrb[0].mxu0
        %508 = vdwg.mxu0
        %509 = vmatprep.subr.mxu0 0.0
        %510 = vmatpush1.msra.mxu0 %v325
        %511 = vmatprep.subr.mxu0 0.0
        %512 = vmatpush1.msra.mxu0 %v326
        %513 = vmatprep.subr.mxu0 0.0
        %514 = vmatpush1.msra.mxu0 %v327
        %515 = vmatprep.subr.mxu0 0.0
        %516 = vmatpush1.msra.mxu0 %v328
        %517 = vmatprep.subr.mxu0 0.0
        %518 = vmatpush1.msra.mxu0 0.0
        %519 = vmatprep.subr.mxu0 0.0
        %520 = vmatpush1.msra.mxu0 0.0
        %521 = vmatprep.subr.mxu0 0.0
        %522 = vmatpush1.msra.mxu0 0.0
        %523 = vmatprep.subr.mxu0 0.0
        %524 = vmatpush1.msra.mxu0 0.0
        %525 = vmatprep.subr.mxu0 0.0
        %526 = vmatpush1.msra.mxu0 0.0
        %527 = vmatprep.subr.mxu0 0.0
        %528 = vmatpush1.msra.mxu0 0.0
        %529 = vmatprep.subr.mxu0 0.0
        %530 = vmatpush1.msra.mxu0 0.0
        %531 = vmatprep.subr.mxu0 0.0
        %532 = vmatpush1.msra.mxu0 0.0
        %533 = vmatprep.subr.mxu0 0.0
        %534 = vmatpush1.msra.mxu0 0.0
        %535 = vmatprep.subr.mxu0 0.0
        %536 = vmatpush1.msra.mxu0 0.0
        %537 = vmatprep.subr.mxu0 0.0
        %538 = vmatpush1.msra.mxu0 0.0
        %539 = vmatprep.subr.mxu0 0.0
        %540 = vmatpush1.msra.mxu0 0.0
        %541 = vmatprep.subr.mxu0 0.0
        %542 = vmatpush1.msra.mxu0 0.0
        %543 = vmatprep.subr.mxu0 0.0
        %544 = vmatpush1.msra.mxu0 0.0
        %545 = vmatprep.subr.mxu0 0.0
        %546 = vmatpush1.msra.mxu0 0.0
        %547 = vmatprep.subr.mxu0 0.0
        %548 = vmatpush1.msra.mxu0 0.0
        %549 = vmatprep.subr.mxu0 0.0
        %550 = vmatpush1.msra.mxu0 0.0
        %551 = vmatprep.subr.mxu0 0.0
        %552 = vmatpush1.msra.mxu0 0.0
        %553 = vmatprep.subr.mxu0 0.0
        %554 = vmatpush1.msra.mxu0 0.0
        %555 = vmatprep.subr.mxu0 0.0
        %556 = vmatpush1.msra.mxu0 0.0
        %557 = vmatprep.subr.mxu0 0.0
        %558 = vmatpush1.msra.mxu0 0.0
        %559 = vmatprep.subr.mxu0 0.0
        %560 = vmatpush1.msra.mxu0 0.0
        %561 = vmatprep.subr.mxu0 0.0
        %562 = vmatpush1.msra.mxu0 0.0
        %563 = vmatprep.subr.mxu0 0.0
        %564 = vmatpush1.msra.mxu0 0.0
        %565 = vmatprep.subr.mxu0 0.0
        %566 = vmatpush1.msra.mxu0 0.0
        %567 = vmatprep.subr.mxu0 0.0
        %568 = vmatpush1.msra.mxu0 0.0
        %569 = vmatprep.subr.mxu0 0.0
        %570 = vmatpush1.msra.mxu0 0.0
        %571 = vmatprep.subr.mxu0 0.0
        %572 = vmatpush1.msra.mxu0 0.0
        %573 = vmatprep.mubr.f32.mxu0 0.0
        %574 = vmatmul.mubr.f32.gmra.mrb[0].mxu0 %v367
        %v575 = vpop.f32.mrb[0].mxu0
        %v576 = vadd.f32 0.0, %v575
        %v577 = vpop.f32.mrb[0].mxu0
        %578 = vdwg.mxu0
        %579 = vmatprep.subr.mxu0 0.0
        %580 = vmatpush1.msra.mxu0 %v329
        %581 = vmatprep.subr.mxu0 0.0
        %582 = vmatpush1.msra.mxu0 %v330
        %583 = vmatprep.subr.mxu0 0.0
        %584 = vmatpush1.msra.mxu0 %v331
        %585 = vmatprep.subr.mxu0 0.0
        %586 = vmatpush1.msra.mxu0 %v332
        %587 = vmatprep.subr.mxu0 0.0
        %588 = vmatpush1.msra.mxu0 0.0
        %589 = vmatprep.subr.mxu0 0.0
        %590 = vmatpush1.msra.mxu0 0.0
        %591 = vmatprep.subr.mxu0 0.0
        %592 = vmatpush1.msra.mxu0 0.0
        %593 = vmatprep.subr.mxu0 0.0
        %594 = vmatpush1.msra.mxu0 0.0
        %595 = vmatprep.subr.mxu0 0.0
        %596 = vmatpush1.msra.mxu0 0.0
        %597 = vmatprep.subr.mxu0 0.0
        %598 = vmatpush1.msra.mxu0 0.0
        %599 = vmatprep.subr.mxu0 0.0
        %600 = vmatpush1.msra.mxu0 0.0
        %601 = vmatprep.subr.mxu0 0.0
        %602 = vmatpush1.msra.mxu0 0.0
        %603 = vmatprep.subr.mxu0 0.0
        %604 = vmatpush1.msra.mxu0 0.0
        %605 = vmatprep.subr.mxu0 0.0
        %606 = vmatpush1.msra.mxu0 0.0
        %607 = vmatprep.subr.mxu0 0.0
        %608 = vmatpush1.msra.mxu0 0.0
        %609 = vmatprep.subr.mxu0 0.0
        %610 = vmatpush1.msra.mxu0 0.0
        %611 = vmatprep.subr.mxu0 0.0
        %612 = vmatpush1.msra.mxu0 0.0
        %613 = vmatprep.subr.mxu0 0.0
        %614 = vmatpush1.msra.mxu0 0.0
        %615 = vmatprep.subr.mxu0 0.0
        %616 = vmatpush1.msra.mxu0 0.0
        %617 = vmatprep.subr.mxu0 0.0
        %618 = vmatpush1.msra.mxu0 0.0
        %619 = vmatprep.subr.mxu0 0.0
        %620 = vmatpush1.msra.mxu0 0.0
        %621 = vmatprep.subr.mxu0 0.0
        %622 = vmatpush1.msra.mxu0 0.0
        %623 = vmatprep.subr.mxu0 0.0
        %624 = vmatpush1.msra.mxu0 0.0
        %625 = vmatprep.subr.mxu0 0.0
        %626 = vmatpush1.msra.mxu0 0.0
        %627 = vmatprep.subr.mxu0 0.0
        %628 = vmatpush1.msra.mxu0 0.0
        %629 = vmatprep.subr.mxu0 0.0
        %630 = vmatpush1.msra.mxu0 0.0
        %631 = vmatprep.subr.mxu0 0.0
        %632 = vmatpush1.msra.mxu0 0.0
        %633 = vmatprep.subr.mxu0 0.0
        %634 = vmatpush1.msra.mxu0 0.0
        %635 = vmatprep.subr.mxu0 0.0
        %636 = vmatpush1.msra.mxu0 0.0
        %637 = vmatprep.subr.mxu0 0.0
        %638 = vmatpush1.msra.mxu0 0.0
        %639 = vmatprep.subr.mxu0 0.0
        %640 = vmatpush1.msra.mxu0 0.0
        %641 = vmatprep.subr.mxu0 0.0
        %642 = vmatpush1.msra.mxu0 0.0
        %643 = vmatprep.mubr.f32.mxu0 0.0
        %644 = vmatmul.mubr.f32.gmra.mrb[0].mxu0 %v367
        %v645 = vpop.f32.mrb[0].mxu0
        %v646 = vadd.f32 0.0, %v645
        %v647 = vpop.f32.mrb[0].mxu0
        %648 = vdwg.mxu0
        %649 = vmatprep.subr.mxu0 0.0
        %650 = vmatpush1.msra.mxu0 %v333
        %651 = vmatprep.subr.mxu0 0.0
        %652 = vmatpush1.msra.mxu0 %v334
        %653 = vmatprep.subr.mxu0 0.0
        %654 = vmatpush1.msra.mxu0 %v335
        %655 = vmatprep.subr.mxu0 0.0
        %656 = vmatpush1.msra.mxu0 %v336
        %657 = vmatprep.subr.mxu0 0.0
        %658 = vmatpush1.msra.mxu0 0.0
        %659 = vmatprep.subr.mxu0 0.0
        %660 = vmatpush1.msra.mxu0 0.0
        %661 = vmatprep.subr.mxu0 0.0
        %662 = vmatpush1.msra.mxu0 0.0
        %663 = vmatprep.subr.mxu0 0.0
        %664 = vmatpush1.msra.mxu0 0.0
        %665 = vmatprep.subr.mxu0 0.0
        %666 = vmatpush1.msra.mxu0 0.0
        %667 = vmatprep.subr.mxu0 0.0
        %668 = vmatpush1.msra.mxu0 0.0
        %669 = vmatprep.subr.mxu0 0.0
        %670 = vmatpush1.msra.mxu0 0.0
        %671 = vmatprep.subr.mxu0 0.0
        %672 = vmatpush1.msra.mxu0 0.0
        %673 = vmatprep.subr.mxu0 0.0
        %674 = vmatpush1.msra.mxu0 0.0
        %675 = vmatprep.subr.mxu0 0.0
        %676 = vmatpush1.msra.mxu0 0.0
        %677 = vmatprep.subr.mxu0 0.0
        %678 = vmatpush1.msra.mxu0 0.0
        %679 = vmatprep.subr.mxu0 0.0
        %680 = vmatpush1.msra.mxu0 0.0
        %681 = vmatprep.subr.mxu0 0.0
        %682 = vmatpush1.msra.mxu0 0.0
        %683 = vmatprep.subr.mxu0 0.0
        %684 = vmatpush1.msra.mxu0 0.0
        %685 = vmatprep.subr.mxu0 0.0
        %686 = vmatpush1.msra.mxu0 0.0
        %687 = vmatprep.subr.mxu0 0.0
        %688 = vmatpush1.msra.mxu0 0.0
        %689 = vmatprep.subr.mxu0 0.0
        %690 = vmatpush1.msra.mxu0 0.0
        %691 = vmatprep.subr.mxu0 0.0
        %692 = vmatpush1.msra.mxu0 0.0
        %693 = vmatprep.subr.mxu0 0.0
        %694 = vmatpush1.msra.mxu0 0.0
        %695 = vmatprep.subr.mxu0 0.0
        %696 = vmatpush1.msra.mxu0 0.0
        %697 = vmatprep.subr.mxu0 0.0
        %698 = vmatpush1.msra.mxu0 0.0
        %699 = vmatprep.subr.mxu0 0.0
        %700 = vmatpush1.msra.mxu0 0.0
        %701 = vmatprep.subr.mxu0 0.0
        %702 = vmatpush1.msra.mxu0 0.0
        %703 = vmatprep.subr.mxu0 0.0
        %704 = vmatpush1.msra.mxu0 0.0
        %705 = vmatprep.subr.mxu0 0.0
        %706 = vmatpush1.msra.mxu0 0.0
        %707 = vmatprep.subr.mxu0 0.0
        %708 = vmatpush1.msra.mxu0 0.0
        %709 = vmatprep.subr.mxu0 0.0
        %710 = vmatpush1.msra.mxu0 0.0
        %711 = vmatprep.subr.mxu0 0.0
        %712 = vmatpush1.msra.mxu0 0.0
        %713 = vmatprep.mubr.f32.mxu0 0.0
        %714 = vmatmul.mubr.f32.gmra.mrb[0].mxu0 %v367
        %v715 = vpop.f32.mrb[0].mxu0
        %v716 = vadd.f32 0.0, %v715
        %v717 = vpop.f32.mrb[0].mxu0
        %718 = vdwg.mxu0
        %719 = vmatprep.subr.mxu0 0.0
        %720 = vmatpush1.msra.mxu0 %v337
        %721 = vmatprep.subr.mxu0 0.0
        %722 = vmatpush1.msra.mxu0 %v338
        %723 = vmatprep.subr.mxu0 0.0
        %724 = vmatpush1.msra.mxu0 %v339
        %725 = vmatprep.subr.mxu0 0.0
        %726 = vmatpush1.msra.mxu0 %v340
        %727 = vmatprep.subr.mxu0 0.0
        %728 = vmatpush1.msra.mxu0 0.0
        %729 = vmatprep.subr.mxu0 0.0
        %730 = vmatpush1.msra.mxu0 0.0
        %731 = vmatprep.subr.mxu0 0.0
        %732 = vmatpush1.msra.mxu0 0.0
        %733 = vmatprep.subr.mxu0 0.0
        %734 = vmatpush1.msra.mxu0 0.0
        %735 = vmatprep.subr.mxu0 0.0
        %736 = vmatpush1.msra.mxu0 0.0
        %737 = vmatprep.subr.mxu0 0.0
        %738 = vmatpush1.msra.mxu0 0.0
        %739 = vmatprep.subr.mxu0 0.0
        %740 = vmatpush1.msra.mxu0 0.0
        %741 = vmatprep.subr.mxu0 0.0
        %742 = vmatpush1.msra.mxu0 0.0
        %743 = vmatprep.subr.mxu0 0.0
        %744 = vmatpush1.msra.mxu0 0.0
        %745 = vmatprep.subr.mxu0 0.0
        %746 = vmatpush1.msra.mxu0 0.0
        %747 = vmatprep.subr.mxu0 0.0
        %748 = vmatpush1.msra.mxu0 0.0
        %749 = vmatprep.subr.mxu0 0.0
        %750 = vmatpush1.msra.mxu0 0.0
        %751 = vmatprep.subr.mxu0 0.0
        %752 = vmatpush1.msra.mxu0 0.0
        %753 = vmatprep.subr.mxu0 0.0
        %754 = vmatpush1.msra.mxu0 0.0
        %755 = vmatprep.subr.mxu0 0.0
        %756 = vmatpush1.msra.mxu0 0.0
        %757 = vmatprep.subr.mxu0 0.0
        %758 = vmatpush1.msra.mxu0 0.0
        %759 = vmatprep.subr.mxu0 0.0
        %760 = vmatpush1.msra.mxu0 0.0
        %761 = vmatprep.subr.mxu0 0.0
        %762 = vmatpush1.msra.mxu0 0.0
        %763 = vmatprep.subr.mxu0 0.0
        %764 = vmatpush1.msra.mxu0 0.0
        %765 = vmatprep.subr.mxu0 0.0
        %766 = vmatpush1.msra.mxu0 0.0
        %767 = vmatprep.subr.mxu0 0.0
        %768 = vmatpush1.msra.mxu0 0.0
        %769 = vmatprep.subr.mxu0 0.0
        %770 = vmatpush1.msra.mxu0 0.0
        %771 = vmatprep.subr.mxu0 0.0
        %772 = vmatpush1.msra.mxu0 0.0
        %773 = vmatprep.subr.mxu0 0.0
        %774 = vmatpush1.msra.mxu0 0.0
        %775 = vmatprep.subr.mxu0 0.0
        %776 = vmatpush1.msra.mxu0 0.0
        %777 = vmatprep.subr.mxu0 0.0
        %778 = vmatpush1.msra.mxu0 0.0
        %779 = vmatprep.subr.mxu0 0.0
        %780 = vmatpush1.msra.mxu0 0.0
        %781 = vmatprep.subr.mxu0 0.0
        %782 = vmatpush1.msra.mxu0 0.0
        %783 = vmatprep.mubr.f32.mxu0 0.0
        %784 = vmatmul.mubr.f32.gmra.mrb[0].mxu0 %v367
        %v785 = vpop.f32.mrb[0].mxu0
        %v786 = vadd.f32 0.0, %v785
        %v787 = vpop.f32.mrb[0].mxu0
        %788 = vdwg.mxu0
        %789 = vmatprep.subr.mxu0 0.0
        %790 = vmatpush1.msra.mxu0 %v341
        %791 = vmatprep.subr.mxu0 0.0
        %792 = vmatpush1.msra.mxu0 %v342
        %793 = vmatprep.subr.mxu0 0.0
        %794 = vmatpush1.msra.mxu0 %v343
        %795 = vmatprep.subr.mxu0 0.0
        %796 = vmatpush1.msra.mxu0 %v344
        %797 = vmatprep.subr.mxu0 0.0
        %798 = vmatpush1.msra.mxu0 0.0
        %799 = vmatprep.subr.mxu0 0.0
        %800 = vmatpush1.msra.mxu0 0.0
        %801 = vmatprep.subr.mxu0 0.0
        %802 = vmatpush1.msra.mxu0 0.0
        %803 = vmatprep.subr.mxu0 0.0
        %804 = vmatpush1.msra.mxu0 0.0
        %805 = vmatprep.subr.mxu0 0.0
        %806 = vmatpush1.msra.mxu0 0.0
        %807 = vmatprep.subr.mxu0 0.0
        %808 = vmatpush1.msra.mxu0 0.0
        %809 = vmatprep.subr.mxu0 0.0
        %810 = vmatpush1.msra.mxu0 0.0
        %811 = vmatprep.subr.mxu0 0.0
        %812 = vmatpush1.msra.mxu0 0.0
        %813 = vmatprep.subr.mxu0 0.0
        %814 = vmatpush1.msra.mxu0 0.0
        %815 = vmatprep.subr.mxu0 0.0
        %816 = vmatpush1.msra.mxu0 0.0
        %817 = vmatprep.subr.mxu0 0.0
        %818 = vmatpush1.msra.mxu0 0.0
        %819 = vmatprep.subr.mxu0 0.0
        %820 = vmatpush1.msra.mxu0 0.0
        %821 = vmatprep.subr.mxu0 0.0
        %822 = vmatpush1.msra.mxu0 0.0
        %823 = vmatprep.subr.mxu0 0.0
        %824 = vmatpush1.msra.mxu0 0.0
        %825 = vmatprep.subr.mxu0 0.0
        %826 = vmatpush1.msra.mxu0 0.0
        %827 = vmatprep.subr.mxu0 0.0
        %828 = vmatpush1.msra.mxu0 0.0
        %829 = vmatprep.subr.mxu0 0.0
        %830 = vmatpush1.msra.mxu0 0.0
        %831 = vmatprep.subr.mxu0 0.0
        %832 = vmatpush1.msra.mxu0 0.0
        %833 = vmatprep.subr.mxu0 0.0
        %834 = vmatpush1.msra.mxu0 0.0
        %835 = vmatprep.subr.mxu0 0.0
        %836 = vmatpush1.msra.mxu0 0.0
        %837 = vmatprep.subr.mxu0 0.0
        %838 = vmatpush1.msra.mxu0 0.0
        %839 = vmatprep.subr.mxu0 0.0
        %840 = vmatpush1.msra.mxu0 0.0
        %841 = vmatprep.subr.mxu0 0.0
        %842 = vmatpush1.msra.mxu0 0.0
        %843 = vmatprep.subr.mxu0 0.0
        %844 = vmatpush1.msra.mxu0 0.0
        %845 = vmatprep.subr.mxu0 0.0
        %846 = vmatpush1.msra.mxu0 0.0
        %847 = vmatprep.subr.mxu0 0.0
        %848 = vmatpush1.msra.mxu0 0.0
        %849 = vmatprep.subr.mxu0 0.0
        %850 = vmatpush1.msra.mxu0 0.0
        %851 = vmatprep.subr.mxu0 0.0
        %852 = vmatpush1.msra.mxu0 0.0
        %853 = vmatprep.mubr.f32.mxu0 0.0
        %854 = vmatmul.mubr.f32.gmra.mrb[0].mxu0 %v367
        %v855 = vpop.f32.mrb[0].mxu0
        %v856 = vadd.f32 0.0, %v855
        %v857 = vpop.f32.mrb[0].mxu0
        %858 = vdwg.mxu0
        %859 = vmatprep.subr.mxu0 0.0
        %860 = vmatpush1.msra.mxu0 %v345
        %861 = vmatprep.subr.mxu0 0.0
        %862 = vmatpush1.msra.mxu0 %v346
        %863 = vmatprep.subr.mxu0 0.0
        %864 = vmatpush1.msra.mxu0 %v347
        %865 = vmatprep.subr.mxu0 0.0
        %866 = vmatpush1.msra.mxu0 %v348
        %867 = vmatprep.subr.mxu0 0.0
        %868 = vmatpush1.msra.mxu0 0.0
        %869 = vmatprep.subr.mxu0 0.0
        %870 = vmatpush1.msra.mxu0 0.0
        %871 = vmatprep.subr.mxu0 0.0
        %872 = vmatpush1.msra.mxu0 0.0
        %873 = vmatprep.subr.mxu0 0.0
        %874 = vmatpush1.msra.mxu0 0.0
        %875 = vmatprep.subr.mxu0 0.0
        %876 = vmatpush1.msra.mxu0 0.0
        %877 = vmatprep.subr.mxu0 0.0
        %878 = vmatpush1.msra.mxu0 0.0
        %879 = vmatprep.subr.mxu0 0.0
        %880 = vmatpush1.msra.mxu0 0.0
        %881 = vmatprep.subr.mxu0 0.0
        %882 = vmatpush1.msra.mxu0 0.0
        %883 = vmatprep.subr.mxu0 0.0
        %884 = vmatpush1.msra.mxu0 0.0
        %885 = vmatprep.subr.mxu0 0.0
        %886 = vmatpush1.msra.mxu0 0.0
        %887 = vmatprep.subr.mxu0 0.0
        %888 = vmatpush1.msra.mxu0 0.0
        %889 = vmatprep.subr.mxu0 0.0
        %890 = vmatpush1.msra.mxu0 0.0
        %891 = vmatprep.subr.mxu0 0.0
        %892 = vmatpush1.msra.mxu0 0.0
        %893 = vmatprep.subr.mxu0 0.0
        %894 = vmatpush1.msra.mxu0 0.0
        %895 = vmatprep.subr.mxu0 0.0
        %896 = vmatpush1.msra.mxu0 0.0
        %897 = vmatprep.subr.mxu0 0.0
        %898 = vmatpush1.msra.mxu0 0.0
        %899 = vmatprep.subr.mxu0 0.0
        %900 = vmatpush1.msra.mxu0 0.0
        %901 = vmatprep.subr.mxu0 0.0
        %902 = vmatpush1.msra.mxu0 0.0
        %903 = vmatprep.subr.mxu0 0.0
        %904 = vmatpush1.msra.mxu0 0.0
        %905 = vmatprep.subr.mxu0 0.0
        %906 = vmatpush1.msra.mxu0 0.0
        %907 = vmatprep.subr.mxu0 0.0
        %908 = vmatpush1.msra.mxu0 0.0
        %909 = vmatprep.subr.mxu0 0.0
        %910 = vmatpush1.msra.mxu0 0.0
        %911 = vmatprep.subr.mxu0 0.0
        %912 = vmatpush1.msra.mxu0 0.0
        %913 = vmatprep.subr.mxu0 0.0
        %914 = vmatpush1.msra.mxu0 0.0
        %915 = vmatprep.subr.mxu0 0.0
        %916 = vmatpush1.msra.mxu0 0.0
        %917 = vmatprep.subr.mxu0 0.0
        %918 = vmatpush1.msra.mxu0 0.0
        %919 = vmatprep.subr.mxu0 0.0
        %920 = vmatpush1.msra.mxu0 0.0
        %921 = vmatprep.subr.mxu0 0.0
        %922 = vmatpush1.msra.mxu0 0.0
        %923 = vmatprep.mubr.f32.mxu0 0.0
        %924 = vmatmul.mubr.f32.gmra.mrb[0].mxu0 %v367
        %v925 = vpop.f32.mrb[0].mxu0
        %v926 = vadd.f32 0.0, %v925
        %v927 = vpop.f32.mrb[0].mxu0
        %928 = vdwg.mxu0
        %929 = vmatprep.subr.mxu0 0.0
        %930 = vmatpush1.msra.mxu0 %v349
        %931 = vmatprep.subr.mxu0 0.0
        %932 = vmatpush1.msra.mxu0 %v350
        %933 = vmatprep.subr.mxu0 0.0
        %934 = vmatpush1.msra.mxu0 %v351
        %935 = vmatprep.subr.mxu0 0.0
        %936 = vmatpush1.msra.mxu0 %v352
        %937 = vmatprep.subr.mxu0 0.0
        %938 = vmatpush1.msra.mxu0 0.0
        %939 = vmatprep.subr.mxu0 0.0
        %940 = vmatpush1.msra.mxu0 0.0
        %941 = vmatprep.subr.mxu0 0.0
        %942 = vmatpush1.msra.mxu0 0.0
        %943 = vmatprep.subr.mxu0 0.0
        %944 = vmatpush1.msra.mxu0 0.0
        %945 = vmatprep.subr.mxu0 0.0
        %946 = vmatpush1.msra.mxu0 0.0
        %947 = vmatprep.subr.mxu0 0.0
        %948 = vmatpush1.msra.mxu0 0.0
        %949 = vmatprep.subr.mxu0 0.0
        %950 = vmatpush1.msra.mxu0 0.0
        %951 = vmatprep.subr.mxu0 0.0
        %952 = vmatpush1.msra.mxu0 0.0
        %953 = vmatprep.subr.mxu0 0.0
        %954 = vmatpush1.msra.mxu0 0.0
        %955 = vmatprep.subr.mxu0 0.0
        %956 = vmatpush1.msra.mxu0 0.0
        %957 = vmatprep.subr.mxu0 0.0
        %958 = vmatpush1.msra.mxu0 0.0
        %959 = vmatprep.subr.mxu0 0.0
        %960 = vmatpush1.msra.mxu0 0.0
        %961 = vmatprep.subr.mxu0 0.0
        %962 = vmatpush1.msra.mxu0 0.0
        %963 = vmatprep.subr.mxu0 0.0
        %964 = vmatpush1.msra.mxu0 0.0
        %965 = vmatprep.subr.mxu0 0.0
        %966 = vmatpush1.msra.mxu0 0.0
        %967 = vmatprep.subr.mxu0 0.0
        %968 = vmatpush1.msra.mxu0 0.0
        %969 = vmatprep.subr.mxu0 0.0
        %970 = vmatpush1.msra.mxu0 0.0
        %971 = vmatprep.subr.mxu0 0.0
        %972 = vmatpush1.msra.mxu0 0.0
        %973 = vmatprep.subr.mxu0 0.0
        %974 = vmatpush1.msra.mxu0 0.0
        %975 = vmatprep.subr.mxu0 0.0
        %976 = vmatpush1.msra.mxu0 0.0
        %977 = vmatprep.subr.mxu0 0.0
        %978 = vmatpush1.msra.mxu0 0.0
        %979 = vmatprep.subr.mxu0 0.0
        %980 = vmatpush1.msra.mxu0 0.0
        %981 = vmatprep.subr.mxu0 0.0
        %982 = vmatpush1.msra.mxu0 0.0
        %983 = vmatprep.subr.mxu0 0.0
        %984 = vmatpush1.msra.mxu0 0.0
        %985 = vmatprep.subr.mxu0 0.0
        %986 = vmatpush1.msra.mxu0 0.0
        %987 = vmatprep.subr.mxu0 0.0
        %988 = vmatpush1.msra.mxu0 0.0
        %989 = vmatprep.subr.mxu0 0.0
        %990 = vmatpush1.msra.mxu0 0.0
        %991 = vmatprep.subr.mxu0 0.0
        %992 = vmatpush1.msra.mxu0 0.0
        %993 = vmatprep.mubr.f32.mxu0 0.0
        %994 = vmatmul.mubr.f32.gmra.mrb[0].mxu0 %v367
        %v995 = vpop.f32.mrb[0].mxu0
        %v996 = vadd.f32 0.0, %v995
        %v997 = vpop.f32.mrb[0].mxu0
        %998 = vdwg.mxu0
        %999 = vmatprep.subr.mxu0 0.0
        %1000 = vmatpush1.msra.mxu0 %v353
        %1001 = vmatprep.subr.mxu0 0.0
        %1002 = vmatpush1.msra.mxu0 %v354
        %1003 = vmatprep.subr.mxu0 0.0
        %1004 = vmatpush1.msra.mxu0 %v355
        %1005 = vmatprep.subr.mxu0 0.0
        %1006 = vmatpush1.msra.mxu0 %v356
        %1007 = vmatprep.subr.mxu0 0.0
        %1008 = vmatpush1.msra.mxu0 0.0
        %1009 = vmatprep.subr.mxu0 0.0
        %1010 = vmatpush1.msra.mxu0 0.0
        %1011 = vmatprep.subr.mxu0 0.0
        %1012 = vmatpush1.msra.mxu0 0.0
        %1013 = vmatprep.subr.mxu0 0.0
        %1014 = vmatpush1.msra.mxu0 0.0
        %1015 = vmatprep.subr.mxu0 0.0
        %1016 = vmatpush1.msra.mxu0 0.0
        %1017 = vmatprep.subr.mxu0 0.0
        %1018 = vmatpush1.msra.mxu0 0.0
        %1019 = vmatprep.subr.mxu0 0.0
        %1020 = vmatpush1.msra.mxu0 0.0
        %1021 = vmatprep.subr.mxu0 0.0
        %1022 = vmatpush1.msra.mxu0 0.0
        %1023 = vmatprep.subr.mxu0 0.0
        %1024 = vmatpush1.msra.mxu0 0.0
        %1025 = vmatprep.subr.mxu0 0.0
        %1026 = vmatpush1.msra.mxu0 0.0
        %1027 = vmatprep.subr.mxu0 0.0
        %1028 = vmatpush1.msra.mxu0 0.0
        %1029 = vmatprep.subr.mxu0 0.0
        %1030 = vmatpush1.msra.mxu0 0.0
        %1031 = vmatprep.subr.mxu0 0.0
        %1032 = vmatpush1.msra.mxu0 0.0
        %1033 = vmatprep.subr.mxu0 0.0
        %1034 = vmatpush1.msra.mxu0 0.0
        %1035 = vmatprep.subr.mxu0 0.0
        %1036 = vmatpush1.msra.mxu0 0.0
        %1037 = vmatprep.subr.mxu0 0.0
        %1038 = vmatpush1.msra.mxu0 0.0
        %1039 = vmatprep.subr.mxu0 0.0
        %1040 = vmatpush1.msra.mxu0 0.0
        %1041 = vmatprep.subr.mxu0 0.0
        %1042 = vmatpush1.msra.mxu0 0.0
        %1043 = vmatprep.subr.mxu0 0.0
        %1044 = vmatpush1.msra.mxu0 0.0
        %1045 = vmatprep.subr.mxu0 0.0
        %1046 = vmatpush1.msra.mxu0 0.0
        %1047 = vmatprep.subr.mxu0 0.0
        %1048 = vmatpush1.msra.mxu0 0.0
        %1049 = vmatprep.subr.mxu0 0.0
        %1050 = vmatpush1.msra.mxu0 0.0
        %1051 = vmatprep.subr.mxu0 0.0
        %1052 = vmatpush1.msra.mxu0 0.0
        %1053 = vmatprep.subr.mxu0 0.0
        %1054 = vmatpush1.msra.mxu0 0.0
        %1055 = vmatprep.subr.mxu0 0.0
        %1056 = vmatpush1.msra.mxu0 0.0
        %1057 = vmatprep.subr.mxu0 0.0
        %1058 = vmatpush1.msra.mxu0 0.0
        %1059 = vmatprep.subr.mxu0 0.0
        %1060 = vmatpush1.msra.mxu0 0.0
        %1061 = vmatprep.subr.mxu0 0.0
        %1062 = vmatpush1.msra.mxu0 0.0
        %1063 = vmatprep.mubr.f32.mxu0 0.0
        %1064 = vmatmul.mubr.f32.gmra.mrb[0].mxu0 %v367
        %v1065 = vpop.f32.mrb[0].mxu0
        %v1066 = vadd.f32 0.0, %v1065
        %v1067 = vpop.f32.mrb[0].mxu0
        %1068 = vdwg.mxu0
        %1069 = vmatprep.subr.mxu0 0.0
        %1070 = vmatpush1.msra.mxu0 %v357
        %1071 = vmatprep.subr.mxu0 0.0
        %1072 = vmatpush1.msra.mxu0 %v358
        %1073 = vmatprep.subr.mxu0 0.0
        %1074 = vmatpush1.msra.mxu0 %v359
        %1075 = vmatprep.subr.mxu0 0.0
        %1076 = vmatpush1.msra.mxu0 %v360
        %1077 = vmatprep.subr.mxu0 0.0
        %1078 = vmatpush1.msra.mxu0 0.0
        %1079 = vmatprep.subr.mxu0 0.0
        %1080 = vmatpush1.msra.mxu0 0.0
        %1081 = vmatprep.subr.mxu0 0.0
        %1082 = vmatpush1.msra.mxu0 0.0
        %1083 = vmatprep.subr.mxu0 0.0
        %1084 = vmatpush1.msra.mxu0 0.0
        %1085 = vmatprep.subr.mxu0 0.0
        %1086 = vmatpush1.msra.mxu0 0.0
        %1087 = vmatprep.subr.mxu0 0.0
        %1088 = vmatpush1.msra.mxu0 0.0
        %1089 = vmatprep.subr.mxu0 0.0
        %1090 = vmatpush1.msra.mxu0 0.0
        %1091 = vmatprep.subr.mxu0 0.0
        %1092 = vmatpush1.msra.mxu0 0.0
        %1093 = vmatprep.subr.mxu0 0.0
        %1094 = vmatpush1.msra.mxu0 0.0
        %1095 = vmatprep.subr.mxu0 0.0
        %1096 = vmatpush1.msra.mxu0 0.0
        %1097 = vmatprep.subr.mxu0 0.0
        %1098 = vmatpush1.msra.mxu0 0.0
        %1099 = vmatprep.subr.mxu0 0.0
        %1100 = vmatpush1.msra.mxu0 0.0
        %1101 = vmatprep.subr.mxu0 0.0
        %1102 = vmatpush1.msra.mxu0 0.0
        %1103 = vmatprep.subr.mxu0 0.0
        %1104 = vmatpush1.msra.mxu0 0.0
        %1105 = vmatprep.subr.mxu0 0.0
        %1106 = vmatpush1.msra.mxu0 0.0
        %1107 = vmatprep.subr.mxu0 0.0
        %1108 = vmatpush1.msra.mxu0 0.0
        %1109 = vmatprep.subr.mxu0 0.0
        %1110 = vmatpush1.msra.mxu0 0.0
        %1111 = vmatprep.subr.mxu0 0.0
        %1112 = vmatpush1.msra.mxu0 0.0
        %1113 = vmatprep.subr.mxu0 0.0
        %1114 = vmatpush1.msra.mxu0 0.0
        %1115 = vmatprep.subr.mxu0 0.0
        %1116 = vmatpush1.msra.mxu0 0.0
        %1117 = vmatprep.subr.mxu0 0.0
        %1118 = vmatpush1.msra.mxu0 0.0
        %1119 = vmatprep.subr.mxu0 0.0
        %1120 = vmatpush1.msra.mxu0 0.0
        %1121 = vmatprep.subr.mxu0 0.0
        %1122 = vmatpush1.msra.mxu0 0.0
        %1123 = vmatprep.subr.mxu0 0.0
        %1124 = vmatpush1.msra.mxu0 0.0
        %1125 = vmatprep.subr.mxu0 0.0
        %1126 = vmatpush1.msra.mxu0 0.0
        %1127 = vmatprep.subr.mxu0 0.0
        %1128 = vmatpush1.msra.mxu0 0.0
        %1129 = vmatprep.subr.mxu0 0.0
        %1130 = vmatpush1.msra.mxu0 0.0
        %1131 = vmatprep.subr.mxu0 0.0
        %1132 = vmatpush1.msra.mxu0 0.0
        %1133 = vmatprep.mubr.f32.mxu0 0.0
        %1134 = vmatmul.mubr.f32.gmra.mrb[0].mxu0 %v367
        %v1135 = vpop.f32.mrb[0].mxu0
        %v1136 = vadd.f32 0.0, %v1135
        %v1137 = vpop.f32.mrb[0].mxu0
        %1138 = vdwg.mxu0
        %1139 = vmatprep.subr.mxu0 0.0
        %1140 = vmatpush1.msra.mxu0 %v361
        %1141 = vmatprep.subr.mxu0 0.0
        %1142 = vmatpush1.msra.mxu0 %v362
        %1143 = vmatprep.subr.mxu0 0.0
        %1144 = vmatpush1.msra.mxu0 %v363
        %1145 = vmatprep.subr.mxu0 0.0
        %1146 = vmatpush1.msra.mxu0 %v364
        %1147 = vmatprep.subr.mxu0 0.0
        %1148 = vmatpush1.msra.mxu0 0.0
        %1149 = vmatprep.subr.mxu0 0.0
        %1150 = vmatpush1.msra.mxu0 0.0
        %1151 = vmatprep.subr.mxu0 0.0
        %1152 = vmatpush1.msra.mxu0 0.0
        %1153 = vmatprep.subr.mxu0 0.0
        %1154 = vmatpush1.msra.mxu0 0.0
        %1155 = vmatprep.subr.mxu0 0.0
        %1156 = vmatpush1.msra.mxu0 0.0
        %1157 = vmatprep.subr.mxu0 0.0
        %1158 = vmatpush1.msra.mxu0 0.0
        %1159 = vmatprep.subr.mxu0 0.0
        %1160 = vmatpush1.msra.mxu0 0.0
        %1161 = vmatprep.subr.mxu0 0.0
        %1162 = vmatpush1.msra.mxu0 0.0
        %1163 = vmatprep.subr.mxu0 0.0
        %1164 = vmatpush1.msra.mxu0 0.0
        %1165 = vmatprep.subr.mxu0 0.0
        %1166 = vmatpush1.msra.mxu0 0.0
        %1167 = vmatprep.subr.mxu0 0.0
        %1168 = vmatpush1.msra.mxu0 0.0
        %1169 = vmatprep.subr.mxu0 0.0
        %1170 = vmatpush1.msra.mxu0 0.0
        %1171 = vmatprep.subr.mxu0 0.0
        %1172 = vmatpush1.msra.mxu0 0.0
        %1173 = vmatprep.subr.mxu0 0.0
        %1174 = vmatpush1.msra.mxu0 0.0
        %1175 = vmatprep.subr.mxu0 0.0
        %1176 = vmatpush1.msra.mxu0 0.0
        %1177 = vmatprep.subr.mxu0 0.0
        %1178 = vmatpush1.msra.mxu0 0.0
        %1179 = vmatprep.subr.mxu0 0.0
        %1180 = vmatpush1.msra.mxu0 0.0
        %1181 = vmatprep.subr.mxu0 0.0
        %1182 = vmatpush1.msra.mxu0 0.0
        %1183 = vmatprep.subr.mxu0 0.0
        %1184 = vmatpush1.msra.mxu0 0.0
        %1185 = vmatprep.subr.mxu0 0.0
        %1186 = vmatpush1.msra.mxu0 0.0
        %1187 = vmatprep.subr.mxu0 0.0
        %1188 = vmatpush1.msra.mxu0 0.0
        %1189 = vmatprep.subr.mxu0 0.0
        %1190 = vmatpush1.msra.mxu0 0.0
        %1191 = vmatprep.subr.mxu0 0.0
        %1192 = vmatpush1.msra.mxu0 0.0
        %1193 = vmatprep.subr.mxu0 0.0
        %1194 = vmatpush1.msra.mxu0 0.0
        %1195 = vmatprep.subr.mxu0 0.0
        %1196 = vmatpush1.msra.mxu0 0.0
        %1197 = vmatprep.subr.mxu0 0.0
        %1198 = vmatpush1.msra.mxu0 0.0
        %1199 = vmatprep.subr.mxu0 0.0
        %1200 = vmatpush1.msra.mxu0 0.0
        %1201 = vmatprep.subr.mxu0 0.0
        %1202 = vmatpush1.msra.mxu0 0.0
        %1203 = vmatprep.mubr.f32.mxu0 0.0
        %1204 = vmatmul.mubr.f32.gmra.mrb[0].mxu0 %v367
        %v1205 = vpop.f32.mrb[0].mxu0
        %v1206 = vadd.f32 0.0, %v1205
        %v1207 = vpop.f32.mrb[0].mxu0
        %1208 = vdwg.mxu0
        %v1209 = vmul.f32 %v436, 0.35355338
        %v1210 = vmul.f32 %v506, 0.35355338
        %v1211 = vmul.f32 %v576, 0.35355338
        %v1212 = vmul.f32 %v646, 0.35355338
        %v1214 = vlaneseq
        %v1215 = vshrl.u32 %v1214, 7
        %v1216 = vsub.s32 0, %v1215
        %v1217 = vrot.slane %v316, %v1216
        %vm1219 = vcmask 64512
        %v1221 = vsel %vm1219, %v1209, 0
        %v1224 = vsel %vm1219, %v716, 0
        %1226 = vmatprep.subr.mxu0 0.0
        %1227 = vmatpush1.xpose.msra.mxu0 %v1224
        %1228 = vmatprep.subr.mxu0 0.0
        %1229 = vmatpush1.xpose.msra.mxu0 0.0
        %1230 = vmatprep.subr.mxu0 0.0
        %1231 = vmatpush1.xpose.msra.mxu0 0.0
        %1232 = vmatprep.subr.mxu0 0.0
        %1233 = vmatpush1.xpose.msra.mxu0 0.0
        %1234 = vmatprep.subr.mxu0 0.0
        %1235 = vmatpush1.xpose.msra.mxu0 0.0
        %1236 = vmatprep.subr.mxu0 0.0
        %1237 = vmatpush1.xpose.msra.mxu0 0.0
        %1238 = vmatprep.subr.mxu0 0.0
        %1239 = vmatpush1.xpose.msra.mxu0 0.0
        %1240 = vmatprep.subr.mxu0 0.0
        %1241 = vmatpush1.xpose.msra.mxu0 0.0
        %1242 = vmatprep.subr.mxu0 0.0
        %1243 = vmatpush1.xpose.msra.mxu0 0.0
        %1244 = vmatprep.subr.mxu0 0.0
        %1245 = vmatpush1.xpose.msra.mxu0 0.0
        %1246 = vmatprep.subr.mxu0 0.0
        %1247 = vmatpush1.xpose.msra.mxu0 0.0
        %1248 = vmatprep.subr.mxu0 0.0
        %1249 = vmatpush1.xpose.msra.mxu0 0.0
        %1250 = vmatprep.subr.mxu0 0.0
        %1251 = vmatpush1.xpose.msra.mxu0 0.0
        %1252 = vmatprep.subr.mxu0 0.0
        %1253 = vmatpush1.xpose.msra.mxu0 0.0
        %1254 = vmatprep.subr.mxu0 0.0
        %1255 = vmatpush1.xpose.msra.mxu0 0.0
        %1256 = vmatprep.subr.mxu0 0.0
        %1257 = vmatpush1.xpose.msra.mxu0 0.0
        %1258 = vmatprep.subr.mxu0 0.0
        %1259 = vmatpush1.xpose.msra.mxu0 0.0
        %1260 = vmatprep.subr.mxu0 0.0
        %1261 = vmatpush1.xpose.msra.mxu0 0.0
        %1262 = vmatprep.subr.mxu0 0.0
        %1263 = vmatpush1.xpose.msra.mxu0 0.0
        %1264 = vmatprep.subr.mxu0 0.0
        %1265 = vmatpush1.xpose.msra.mxu0 0.0
        %1266 = vmatprep.subr.mxu0 0.0
        %1267 = vmatpush1.xpose.msra.mxu0 0.0
        %1268 = vmatprep.subr.mxu0 0.0
        %1269 = vmatpush1.xpose.msra.mxu0 0.0
        %1270 = vmatprep.subr.mxu0 0.0
        %1271 = vmatpush1.xpose.msra.mxu0 0.0
        %1272 = vmatprep.subr.mxu0 0.0
        %1273 = vmatpush1.xpose.msra.mxu0 0.0
        %1274 = vmatprep.subr.mxu0 0.0
        %1275 = vmatpush1.xpose.msra.mxu0 0.0
        %1276 = vmatprep.subr.mxu0 0.0
        %1277 = vmatpush1.xpose.msra.mxu0 0.0
        %1278 = vmatprep.subr.mxu0 0.0
        %1279 = vmatpush1.xpose.msra.mxu0 0.0
        %1280 = vmatprep.subr.mxu0 0.0
        %1281 = vmatpush1.xpose.msra.mxu0 0.0
        %1282 = vmatprep.subr.mxu0 0.0
        %1283 = vmatpush1.xpose.msra.mxu0 0.0
        %1284 = vmatprep.subr.mxu0 0.0
        %1285 = vmatpush1.xpose.msra.mxu0 0.0
        %1286 = vmatprep.subr.mxu0 0.0
        %1287 = vmatpush1.xpose.msra.mxu0 0.0
        %1288 = vmatprep.subr.mxu0 0.0
        %1289 = vmatpush1.xpose.msra.mxu0 0.0
        %1290 = vmatprep.mubr.f32.mxu0 0.0
        %1291 = vmatmul.mubr.f32.gmra.mrb[0].mxu0 %v1221
        %v1292 = vpop.f32.mrb[0].mxu0
        %v1293 = vadd.f32 %v1217, %v1292
        %v1294 = vpop.f32.mrb[0].mxu0
        %1295 = vdwg.mxu0
        %v1297 = vsel %vm1219, %v1210, 0
        %v1300 = vsel %vm1219, %v786, 0
        %1302 = vmatprep.subr.mxu0 0.0
        %1303 = vmatpush1.xpose.msra.mxu0 %v1300
        %1304 = vmatprep.subr.mxu0 0.0
        %1305 = vmatpush1.xpose.msra.mxu0 0.0
        %1306 = vmatprep.subr.mxu0 0.0
        %1307 = vmatpush1.xpose.msra.mxu0 0.0
        %1308 = vmatprep.subr.mxu0 0.0
        %1309 = vmatpush1.xpose.msra.mxu0 0.0
        %1310 = vmatprep.subr.mxu0 0.0
        %1311 = vmatpush1.xpose.msra.mxu0 0.0
        %1312 = vmatprep.subr.mxu0 0.0
        %1313 = vmatpush1.xpose.msra.mxu0 0.0
        %1314 = vmatprep.subr.mxu0 0.0
        %1315 = vmatpush1.xpose.msra.mxu0 0.0
        %1316 = vmatprep.subr.mxu0 0.0
        %1317 = vmatpush1.xpose.msra.mxu0 0.0
        %1318 = vmatprep.subr.mxu0 0.0
        %1319 = vmatpush1.xpose.msra.mxu0 0.0
        %1320 = vmatprep.subr.mxu0 0.0
        %1321 = vmatpush1.xpose.msra.mxu0 0.0
        %1322 = vmatprep.subr.mxu0 0.0
        %1323 = vmatpush1.xpose.msra.mxu0 0.0
        %1324 = vmatprep.subr.mxu0 0.0
        %1325 = vmatpush1.xpose.msra.mxu0 0.0
        %1326 = vmatprep.subr.mxu0 0.0
        %1327 = vmatpush1.xpose.msra.mxu0 0.0
        %1328 = vmatprep.subr.mxu0 0.0
        %1329 = vmatpush1.xpose.msra.mxu0 0.0
        %1330 = vmatprep.subr.mxu0 0.0
        %1331 = vmatpush1.xpose.msra.mxu0 0.0
        %1332 = vmatprep.subr.mxu0 0.0
        %1333 = vmatpush1.xpose.msra.mxu0 0.0
        %1334 = vmatprep.subr.mxu0 0.0
        %1335 = vmatpush1.xpose.msra.mxu0 0.0
        %1336 = vmatprep.subr.mxu0 0.0
        %1337 = vmatpush1.xpose.msra.mxu0 0.0
        %1338 = vmatprep.subr.mxu0 0.0
        %1339 = vmatpush1.xpose.msra.mxu0 0.0
        %1340 = vmatprep.subr.mxu0 0.0
        %1341 = vmatpush1.xpose.msra.mxu0 0.0
        %1342 = vmatprep.subr.mxu0 0.0
        %1343 = vmatpush1.xpose.msra.mxu0 0.0
        %1344 = vmatprep.subr.mxu0 0.0
        %1345 = vmatpush1.xpose.msra.mxu0 0.0
        %1346 = vmatprep.subr.mxu0 0.0
        %1347 = vmatpush1.xpose.msra.mxu0 0.0
        %1348 = vmatprep.subr.mxu0 0.0
        %1349 = vmatpush1.xpose.msra.mxu0 0.0
        %1350 = vmatprep.subr.mxu0 0.0
        %1351 = vmatpush1.xpose.msra.mxu0 0.0
        %1352 = vmatprep.subr.mxu0 0.0
        %1353 = vmatpush1.xpose.msra.mxu0 0.0
        %1354 = vmatprep.subr.mxu0 0.0
        %1355 = vmatpush1.xpose.msra.mxu0 0.0
        %1356 = vmatprep.subr.mxu0 0.0
        %1357 = vmatpush1.xpose.msra.mxu0 0.0
        %1358 = vmatprep.subr.mxu0 0.0
        %1359 = vmatpush1.xpose.msra.mxu0 0.0
        %1360 = vmatprep.subr.mxu0 0.0
        %1361 = vmatpush1.xpose.msra.mxu0 0.0
        %1362 = vmatprep.subr.mxu0 0.0
        %1363 = vmatpush1.xpose.msra.mxu0 0.0
        %1364 = vmatprep.subr.mxu0 0.0
        %1365 = vmatpush1.xpose.msra.mxu0 0.0
        %1366 = vmatprep.mubr.f32.mxu0 0.0
        %1367 = vmatmul.mubr.f32.gmra.mrb[0].mxu0 %v1297
        %v1368 = vpop.f32.mrb[0].mxu0
        %v1369 = vadd.f32 %v1217, %v1368
        %v1370 = vpop.f32.mrb[0].mxu0
        %1371 = vdwg.mxu0
        %v1373 = vsel %vm1219, %v1211, 0
        %v1376 = vsel %vm1219, %v856, 0
        %1378 = vmatprep.subr.mxu0 0.0
        %1379 = vmatpush1.xpose.msra.mxu0 %v1376
        %1380 = vmatprep.subr.mxu0 0.0
        %1381 = vmatpush1.xpose.msra.mxu0 0.0
        %1382 = vmatprep.subr.mxu0 0.0
        %1383 = vmatpush1.xpose.msra.mxu0 0.0
        %1384 = vmatprep.subr.mxu0 0.0
        %1385 = vmatpush1.xpose.msra.mxu0 0.0
        %1386 = vmatprep.subr.mxu0 0.0
        %1387 = vmatpush1.xpose.msra.mxu0 0.0
        %1388 = vmatprep.subr.mxu0 0.0
        %1389 = vmatpush1.xpose.msra.mxu0 0.0
        %1390 = vmatprep.subr.mxu0 0.0
        %1391 = vmatpush1.xpose.msra.mxu0 0.0
        %1392 = vmatprep.subr.mxu0 0.0
        %1393 = vmatpush1.xpose.msra.mxu0 0.0
        %1394 = vmatprep.subr.mxu0 0.0
        %1395 = vmatpush1.xpose.msra.mxu0 0.0
        %1396 = vmatprep.subr.mxu0 0.0
        %1397 = vmatpush1.xpose.msra.mxu0 0.0
        %1398 = vmatprep.subr.mxu0 0.0
        %1399 = vmatpush1.xpose.msra.mxu0 0.0
        %1400 = vmatprep.subr.mxu0 0.0
        %1401 = vmatpush1.xpose.msra.mxu0 0.0
        %1402 = vmatprep.subr.mxu0 0.0
        %1403 = vmatpush1.xpose.msra.mxu0 0.0
        %1404 = vmatprep.subr.mxu0 0.0
        %1405 = vmatpush1.xpose.msra.mxu0 0.0
        %1406 = vmatprep.subr.mxu0 0.0
        %1407 = vmatpush1.xpose.msra.mxu0 0.0
        %1408 = vmatprep.subr.mxu0 0.0
        %1409 = vmatpush1.xpose.msra.mxu0 0.0
        %1410 = vmatprep.subr.mxu0 0.0
        %1411 = vmatpush1.xpose.msra.mxu0 0.0
        %1412 = vmatprep.subr.mxu0 0.0
        %1413 = vmatpush1.xpose.msra.mxu0 0.0
        %1414 = vmatprep.subr.mxu0 0.0
        %1415 = vmatpush1.xpose.msra.mxu0 0.0
        %1416 = vmatprep.subr.mxu0 0.0
        %1417 = vmatpush1.xpose.msra.mxu0 0.0
        %1418 = vmatprep.subr.mxu0 0.0
        %1419 = vmatpush1.xpose.msra.mxu0 0.0
        %1420 = vmatprep.subr.mxu0 0.0
        %1421 = vmatpush1.xpose.msra.mxu0 0.0
        %1422 = vmatprep.subr.mxu0 0.0
        %1423 = vmatpush1.xpose.msra.mxu0 0.0
        %1424 = vmatprep.subr.mxu0 0.0
        %1425 = vmatpush1.xpose.msra.mxu0 0.0
        %1426 = vmatprep.subr.mxu0 0.0
        %1427 = vmatpush1.xpose.msra.mxu0 0.0
        %1428 = vmatprep.subr.mxu0 0.0
        %1429 = vmatpush1.xpose.msra.mxu0 0.0
        %1430 = vmatprep.subr.mxu0 0.0
        %1431 = vmatpush1.xpose.msra.mxu0 0.0
        %1432 = vmatprep.subr.mxu0 0.0
        %1433 = vmatpush1.xpose.msra.mxu0 0.0
        %1434 = vmatprep.subr.mxu0 0.0
        %1435 = vmatpush1.xpose.msra.mxu0 0.0
        %1436 = vmatprep.subr.mxu0 0.0
        %1437 = vmatpush1.xpose.msra.mxu0 0.0
        %1438 = vmatprep.subr.mxu0 0.0
        %1439 = vmatpush1.xpose.msra.mxu0 0.0
        %1440 = vmatprep.subr.mxu0 0.0
        %1441 = vmatpush1.xpose.msra.mxu0 0.0
        %1442 = vmatprep.mubr.f32.mxu0 0.0
        %1443 = vmatmul.mubr.f32.gmra.mrb[0].mxu0 %v1373
        %v1444 = vpop.f32.mrb[0].mxu0
        %v1445 = vadd.f32 %v1217, %v1444
        %v1446 = vpop.f32.mrb[0].mxu0
        %1447 = vdwg.mxu0
        %v1449 = vsel %vm1219, %v1212, 0
        %v1452 = vsel %vm1219, %v926, 0
        %1454 = vmatprep.subr.mxu0 0.0
        %1455 = vmatpush1.xpose.msra.mxu0 %v1452
        %1456 = vmatprep.subr.mxu0 0.0
        %1457 = vmatpush1.xpose.msra.mxu0 0.0
        %1458 = vmatprep.subr.mxu0 0.0
        %1459 = vmatpush1.xpose.msra.mxu0 0.0
        %1460 = vmatprep.subr.mxu0 0.0
        %1461 = vmatpush1.xpose.msra.mxu0 0.0
        %1462 = vmatprep.subr.mxu0 0.0
        %1463 = vmatpush1.xpose.msra.mxu0 0.0
        %1464 = vmatprep.subr.mxu0 0.0
        %1465 = vmatpush1.xpose.msra.mxu0 0.0
        %1466 = vmatprep.subr.mxu0 0.0
        %1467 = vmatpush1.xpose.msra.mxu0 0.0
        %1468 = vmatprep.subr.mxu0 0.0
        %1469 = vmatpush1.xpose.msra.mxu0 0.0
        %1470 = vmatprep.subr.mxu0 0.0
        %1471 = vmatpush1.xpose.msra.mxu0 0.0
        %1472 = vmatprep.subr.mxu0 0.0
        %1473 = vmatpush1.xpose.msra.mxu0 0.0
        %1474 = vmatprep.subr.mxu0 0.0
        %1475 = vmatpush1.xpose.msra.mxu0 0.0
        %1476 = vmatprep.subr.mxu0 0.0
        %1477 = vmatpush1.xpose.msra.mxu0 0.0
        %1478 = vmatprep.subr.mxu0 0.0
        %1479 = vmatpush1.xpose.msra.mxu0 0.0
        %1480 = vmatprep.subr.mxu0 0.0
        %1481 = vmatpush1.xpose.msra.mxu0 0.0
        %1482 = vmatprep.subr.mxu0 0.0
        %1483 = vmatpush1.xpose.msra.mxu0 0.0
        %1484 = vmatprep.subr.mxu0 0.0
        %1485 = vmatpush1.xpose.msra.mxu0 0.0
        %1486 = vmatprep.subr.mxu0 0.0
        %1487 = vmatpush1.xpose.msra.mxu0 0.0
        %1488 = vmatprep.subr.mxu0 0.0
        %1489 = vmatpush1.xpose.msra.mxu0 0.0
        %1490 = vmatprep.subr.mxu0 0.0
        %1491 = vmatpush1.xpose.msra.mxu0 0.0
        %1492 = vmatprep.subr.mxu0 0.0
        %1493 = vmatpush1.xpose.msra.mxu0 0.0
        %1494 = vmatprep.subr.mxu0 0.0
        %1495 = vmatpush1.xpose.msra.mxu0 0.0
        %1496 = vmatprep.subr.mxu0 0.0
        %1497 = vmatpush1.xpose.msra.mxu0 0.0
        %1498 = vmatprep.subr.mxu0 0.0
        %1499 = vmatpush1.xpose.msra.mxu0 0.0
        %1500 = vmatprep.subr.mxu0 0.0
        %1501 = vmatpush1.xpose.msra.mxu0 0.0
        %1502 = vmatprep.subr.mxu0 0.0
        %1503 = vmatpush1.xpose.msra.mxu0 0.0
        %1504 = vmatprep.subr.mxu0 0.0
        %1505 = vmatpush1.xpose.msra.mxu0 0.0
        %1506 = vmatprep.subr.mxu0 0.0
        %1507 = vmatpush1.xpose.msra.mxu0 0.0
        %1508 = vmatprep.subr.mxu0 0.0
        %1509 = vmatpush1.xpose.msra.mxu0 0.0
        %1510 = vmatprep.subr.mxu0 0.0
        %1511 = vmatpush1.xpose.msra.mxu0 0.0
        %1512 = vmatprep.subr.mxu0 0.0
        %1513 = vmatpush1.xpose.msra.mxu0 0.0
        %1514 = vmatprep.subr.mxu0 0.0
        %1515 = vmatpush1.xpose.msra.mxu0 0.0
        %1516 = vmatprep.subr.mxu0 0.0
        %1517 = vmatpush1.xpose.msra.mxu0 0.0
        %1518 = vmatprep.mubr.f32.mxu0 0.0
        %1519 = vmatmul.mubr.f32.gmra.mrb[0].mxu0 %v1449
        %v1520 = vpop.f32.mrb[0].mxu0
        %v1521 = vadd.f32 %v1217, %v1520
        %v1522 = vpop.f32.mrb[0].mxu0
        %1523 = vdwg.mxu0
        %v1524 = vsel %vm1219, %v1293, -inf
        %1525 = vmax.xlane.f32.xlu0 %v1524
        %v1526 = vpop.xlane.xlu0 %1525
        %v1527 = vsel %vm1219, %v1369, -inf
        %1528 = vmax.xlane.f32.xlu0 %v1527
        %v1529 = vpop.xlane.xlu0 %1528
        %v1530 = vsel %vm1219, %v1445, -inf
        %1531 = vmax.xlane.f32.xlu0 %v1530
        %v1532 = vpop.xlane.xlu0 %1531
        %v1533 = vsel %vm1219, %v1521, -inf
        %1534 = vmax.xlane.f32.xlu0 %v1533
        %v1535 = vpop.xlane.xlu0 %1534
        %v1536 = vsub.f32 %v1293, %v1526
        %v1537 = vsub.f32 %v1369, %v1529
        %v1538 = vsub.f32 %v1445, %v1532
        %v1539 = vsub.f32 %v1521, %v1535
        %v1540 = vmul.f32 %v1536, 1.442695
        %v1541 = vpow.pop %v1540
        %v1542 = vmul.f32 %v1537, 1.442695
        %v1543 = vpow.pop %v1542
        %v1544 = vmul.f32 %v1538, 1.442695
        %v1545 = vpow.pop %v1544
        %v1546 = vmul.f32 %v1539, 1.442695
        %v1547 = vpow.pop %v1546
        %v1548 = vsel %vm1219, %v1541, 0.0
        %1549 = vadd.xlane.f32.xlu0 %v1548
        %v1550 = vpop.xlane.xlu0 %1549
        %v1551 = vsel %vm1219, %v1543, 0.0
        %1552 = vadd.xlane.f32.xlu0 %v1551
        %v1553 = vpop.xlane.xlu0 %1552
        %v1554 = vsel %vm1219, %v1545, 0.0
        %1555 = vadd.xlane.f32.xlu0 %v1554
        %v1556 = vpop.xlane.xlu0 %1555
        %v1557 = vsel %vm1219, %v1547, 0.0
        %1558 = vadd.xlane.f32.xlu0 %v1557
        %v1559 = vpop.xlane.xlu0 %1558
        %v1560 = vrcp.pop %v1550
        %v1561 = vrcp.pop %v1553
        %v1562 = vrcp.pop %v1556
        %v1563 = vrcp.pop %v1559
        %v1564 = vmul.f32 %v1541, %v1560
        %v1565 = vmul.f32 %v1543, %v1561
        %v1566 = vmul.f32 %v1545, %v1562
        %v1567 = vmul.f32 %v1547, %v1563
        %v1569 = vsel %vm1219, %v1564, 0
        %1571 = vmatprep.subr.mxu0 0.0
        %1572 = vmatpush1.msra.mxu0 %v996
        %1573 = vmatprep.subr.mxu0 0.0
        %1574 = vmatpush1.msra.mxu0 0.0
        %1575 = vmatprep.subr.mxu0 0.0
        %1576 = vmatpush1.msra.mxu0 0.0
        %1577 = vmatprep.subr.mxu0 0.0
        %1578 = vmatpush1.msra.mxu0 0.0
        %1579 = vmatprep.subr.mxu0 0.0
        %1580 = vmatpush1.msra.mxu0 0.0
        %1581 = vmatprep.subr.mxu0 0.0
        %1582 = vmatpush1.msra.mxu0 0.0
        %1583 = vmatprep.subr.mxu0 0.0
        %1584 = vmatpush1.msra.mxu0 0.0
        %1585 = vmatprep.subr.mxu0 0.0
        %1586 = vmatpush1.msra.mxu0 0.0
        %1587 = vmatprep.subr.mxu0 0.0
        %1588 = vmatpush1.msra.mxu0 0.0
        %1589 = vmatprep.subr.mxu0 0.0
        %1590 = vmatpush1.msra.mxu0 0.0
        %1591 = vmatprep.subr.mxu0 0.0
        %1592 = vmatpush1.msra.mxu0 0.0
        %1593 = vmatprep.subr.mxu0 0.0
        %1594 = vmatpush1.msra.mxu0 0.0
        %1595 = vmatprep.subr.mxu0 0.0
        %1596 = vmatpush1.msra.mxu0 0.0
        %1597 = vmatprep.subr.mxu0 0.0
        %1598 = vmatpush1.msra.mxu0 0.0
        %1599 = vmatprep.subr.mxu0 0.0
        %1600 = vmatpush1.msra.mxu0 0.0
        %1601 = vmatprep.subr.mxu0 0.0
        %1602 = vmatpush1.msra.mxu0 0.0
        %1603 = vmatprep.subr.mxu0 0.0
        %1604 = vmatpush1.msra.mxu0 0.0
        %1605 = vmatprep.subr.mxu0 0.0
        %1606 = vmatpush1.msra.mxu0 0.0
        %1607 = vmatprep.subr.mxu0 0.0
        %1608 = vmatpush1.msra.mxu0 0.0
        %1609 = vmatprep.subr.mxu0 0.0
        %1610 = vmatpush1.msra.mxu0 0.0
        %1611 = vmatprep.subr.mxu0 0.0
        %1612 = vmatpush1.msra.mxu0 0.0
        %1613 = vmatprep.subr.mxu0 0.0
        %1614 = vmatpush1.msra.mxu0 0.0
        %1615 = vmatprep.subr.mxu0 0.0
        %1616 = vmatpush1.msra.mxu0 0.0
        %1617 = vmatprep.subr.mxu0 0.0
        %1618 = vmatpush1.msra.mxu0 0.0
        %1619 = vmatprep.subr.mxu0 0.0
        %1620 = vmatpush1.msra.mxu0 0.0
        %1621 = vmatprep.subr.mxu0 0.0
        %1622 = vmatpush1.msra.mxu0 0.0
        %1623 = vmatprep.subr.mxu0 0.0
        %1624 = vmatpush1.msra.mxu0 0.0
        %1625 = vmatprep.subr.mxu0 0.0
        %1626 = vmatpush1.msra.mxu0 0.0
        %1627 = vmatprep.subr.mxu0 0.0
        %1628 = vmatpush1.msra.mxu0 0.0
        %1629 = vmatprep.subr.mxu0 0.0
        %1630 = vmatpush1.msra.mxu0 0.0
        %1631 = vmatprep.subr.mxu0 0.0
        %1632 = vmatpush1.msra.mxu0 0.0
        %1633 = vmatprep.subr.mxu0 0.0
        %1634 = vmatpush1.msra.mxu0 0.0
        %1635 = vmatprep.mubr.f32.mxu0 0.0
        %1636 = vmatmul.mubr.f32.gmra.mrb[0].mxu0 %v1569
        %v1637 = vpop.f32.mrb[0].mxu0
        %v1638 = vadd.f32 0.0, %v1637
        %v1639 = vpop.f32.mrb[0].mxu0
        %1640 = vdwg.mxu0
        %v1642 = vsel %vm1219, %v1565, 0
        %1644 = vmatprep.subr.mxu0 0.0
        %1645 = vmatpush1.msra.mxu0 %v1066
        %1646 = vmatprep.subr.mxu0 0.0
        %1647 = vmatpush1.msra.mxu0 0.0
        %1648 = vmatprep.subr.mxu0 0.0
        %1649 = vmatpush1.msra.mxu0 0.0
        %1650 = vmatprep.subr.mxu0 0.0
        %1651 = vmatpush1.msra.mxu0 0.0
        %1652 = vmatprep.subr.mxu0 0.0
        %1653 = vmatpush1.msra.mxu0 0.0
        %1654 = vmatprep.subr.mxu0 0.0
        %1655 = vmatpush1.msra.mxu0 0.0
        %1656 = vmatprep.subr.mxu0 0.0
        %1657 = vmatpush1.msra.mxu0 0.0
        %1658 = vmatprep.subr.mxu0 0.0
        %1659 = vmatpush1.msra.mxu0 0.0
        %1660 = vmatprep.subr.mxu0 0.0
        %1661 = vmatpush1.msra.mxu0 0.0
        %1662 = vmatprep.subr.mxu0 0.0
        %1663 = vmatpush1.msra.mxu0 0.0
        %1664 = vmatprep.subr.mxu0 0.0
        %1665 = vmatpush1.msra.mxu0 0.0
        %1666 = vmatprep.subr.mxu0 0.0
        %1667 = vmatpush1.msra.mxu0 0.0
        %1668 = vmatprep.subr.mxu0 0.0
        %1669 = vmatpush1.msra.mxu0 0.0
        %1670 = vmatprep.subr.mxu0 0.0
        %1671 = vmatpush1.msra.mxu0 0.0
        %1672 = vmatprep.subr.mxu0 0.0
        %1673 = vmatpush1.msra.mxu0 0.0
        %1674 = vmatprep.subr.mxu0 0.0
        %1675 = vmatpush1.msra.mxu0 0.0
        %1676 = vmatprep.subr.mxu0 0.0
        %1677 = vmatpush1.msra.mxu0 0.0
        %1678 = vmatprep.subr.mxu0 0.0
        %1679 = vmatpush1.msra.mxu0 0.0
        %1680 = vmatprep.subr.mxu0 0.0
        %1681 = vmatpush1.msra.mxu0 0.0
        %1682 = vmatprep.subr.mxu0 0.0
        %1683 = vmatpush1.msra.mxu0 0.0
        %1684 = vmatprep.subr.mxu0 0.0
        %1685 = vmatpush1.msra.mxu0 0.0
        %1686 = vmatprep.subr.mxu0 0.0
        %1687 = vmatpush1.msra.mxu0 0.0
        %1688 = vmatprep.subr.mxu0 0.0
        %1689 = vmatpush1.msra.mxu0 0.0
        %1690 = vmatprep.subr.mxu0 0.0
        %1691 = vmatpush1.msra.mxu0 0.0
        %1692 = vmatprep.subr.mxu0 0.0
        %1693 = vmatpush1.msra.mxu0 0.0
        %1694 = vmatprep.subr.mxu0 0.0
        %1695 = vmatpush1.msra.mxu0 0.0
        %1696 = vmatprep.subr.mxu0 0.0
        %1697 = vmatpush1.msra.mxu0 0.0
        %1698 = vmatprep.subr.mxu0 0.0
        %1699 = vmatpush1.msra.mxu0 0.0
        %1700 = vmatprep.subr.mxu0 0.0
        %1701 = vmatpush1.msra.mxu0 0.0
        %1702 = vmatprep.subr.mxu0 0.0
        %1703 = vmatpush1.msra.mxu0 0.0
        %1704 = vmatprep.subr.mxu0 0.0
        %1705 = vmatpush1.msra.mxu0 0.0
        %1706 = vmatprep.subr.mxu0 0.0
        %1707 = vmatpush1.msra.mxu0 0.0
        %1708 = vmatprep.mubr.f32.mxu0 0.0
        %1709 = vmatmul.mubr.f32.gmra.mrb[0].mxu0 %v1642
        %v1710 = vpop.f32.mrb[0].mxu0
        %v1711 = vadd.f32 0.0, %v1710
        %v1712 = vpop.f32.mrb[0].mxu0
        %1713 = vdwg.mxu0
        %v1715 = vsel %vm1219, %v1566, 0
        %1717 = vmatprep.subr.mxu0 0.0
        %1718 = vmatpush1.msra.mxu0 %v1136
        %1719 = vmatprep.subr.mxu0 0.0
        %1720 = vmatpush1.msra.mxu0 0.0
        %1721 = vmatprep.subr.mxu0 0.0
        %1722 = vmatpush1.msra.mxu0 0.0
        %1723 = vmatprep.subr.mxu0 0.0
        %1724 = vmatpush1.msra.mxu0 0.0
        %1725 = vmatprep.subr.mxu0 0.0
        %1726 = vmatpush1.msra.mxu0 0.0
        %1727 = vmatprep.subr.mxu0 0.0
        %1728 = vmatpush1.msra.mxu0 0.0
        %1729 = vmatprep.subr.mxu0 0.0
        %1730 = vmatpush1.msra.mxu0 0.0
        %1731 = vmatprep.subr.mxu0 0.0
        %1732 = vmatpush1.msra.mxu0 0.0
        %1733 = vmatprep.subr.mxu0 0.0
        %1734 = vmatpush1.msra.mxu0 0.0
        %1735 = vmatprep.subr.mxu0 0.0
        %1736 = vmatpush1.msra.mxu0 0.0
        %1737 = vmatprep.subr.mxu0 0.0
        %1738 = vmatpush1.msra.mxu0 0.0
        %1739 = vmatprep.subr.mxu0 0.0
        %1740 = vmatpush1.msra.mxu0 0.0
        %1741 = vmatprep.subr.mxu0 0.0
        %1742 = vmatpush1.msra.mxu0 0.0
        %1743 = vmatprep.subr.mxu0 0.0
        %1744 = vmatpush1.msra.mxu0 0.0
        %1745 = vmatprep.subr.mxu0 0.0
        %1746 = vmatpush1.msra.mxu0 0.0
        %1747 = vmatprep.subr.mxu0 0.0
        %1748 = vmatpush1.msra.mxu0 0.0
        %1749 = vmatprep.subr.mxu0 0.0
        %1750 = vmatpush1.msra.mxu0 0.0
        %1751 = vmatprep.subr.mxu0 0.0
        %1752 = vmatpush1.msra.mxu0 0.0
        %1753 = vmatprep.subr.mxu0 0.0
        %1754 = vmatpush1.msra.mxu0 0.0
        %1755 = vmatprep.subr.mxu0 0.0
        %1756 = vmatpush1.msra.mxu0 0.0
        %1757 = vmatprep.subr.mxu0 0.0
        %1758 = vmatpush1.msra.mxu0 0.0
        %1759 = vmatprep.subr.mxu0 0.0
        %1760 = vmatpush1.msra.mxu0 0.0
        %1761 = vmatprep.subr.mxu0 0.0
        %1762 = vmatpush1.msra.mxu0 0.0
        %1763 = vmatprep.subr.mxu0 0.0
        %1764 = vmatpush1.msra.mxu0 0.0
        %1765 = vmatprep.subr.mxu0 0.0
        %1766 = vmatpush1.msra.mxu0 0.0
        %1767 = vmatprep.subr.mxu0 0.0
        %1768 = vmatpush1.msra.mxu0 0.0
        %1769 = vmatprep.subr.mxu0 0.0
        %1770 = vmatpush1.msra.mxu0 0.0
        %1771 = vmatprep.subr.mxu0 0.0
        %1772 = vmatpush1.msra.mxu0 0.0
        %1773 = vmatprep.subr.mxu0 0.0
        %1774 = vmatpush1.msra.mxu0 0.0
        %1775 = vmatprep.subr.mxu0 0.0
        %1776 = vmatpush1.msra.mxu0 0.0
        %1777 = vmatprep.subr.mxu0 0.0
        %1778 = vmatpush1.msra.mxu0 0.0
        %1779 = vmatprep.subr.mxu0 0.0
        %1780 = vmatpush1.msra.mxu0 0.0
        %1781 = vmatprep.mubr.f32.mxu0 0.0
        %1782 = vmatmul.mubr.f32.gmra.mrb[0].mxu0 %v1715
        %v1783 = vpop.f32.mrb[0].mxu0
        %v1784 = vadd.f32 0.0, %v1783
        %v1785 = vpop.f32.mrb[0].mxu0
        %1786 = vdwg.mxu0
        %v1788 = vsel %vm1219, %v1567, 0
        %1790 = vmatprep.subr.mxu0 0.0
        %1791 = vmatpush1.msra.mxu0 %v1206
        %1792 = vmatprep.subr.mxu0 0.0
        %1793 = vmatpush1.msra.mxu0 0.0
        %1794 = vmatprep.subr.mxu0 0.0
        %1795 = vmatpush1.msra.mxu0 0.0
        %1796 = vmatprep.subr.mxu0 0.0
        %1797 = vmatpush1.msra.mxu0 0.0
        %1798 = vmatprep.subr.mxu0 0.0
        %1799 = vmatpush1.msra.mxu0 0.0
        %1800 = vmatprep.subr.mxu0 0.0
        %1801 = vmatpush1.msra.mxu0 0.0
        %1802 = vmatprep.subr.mxu0 0.0
        %1803 = vmatpush1.msra.mxu0 0.0
        %1804 = vmatprep.subr.mxu0 0.0
        %1805 = vmatpush1.msra.mxu0 0.0
        %1806 = vmatprep.subr.mxu0 0.0
        %1807 = vmatpush1.msra.mxu0 0.0
        %1808 = vmatprep.subr.mxu0 0.0
        %1809 = vmatpush1.msra.mxu0 0.0
        %1810 = vmatprep.subr.mxu0 0.0
        %1811 = vmatpush1.msra.mxu0 0.0
        %1812 = vmatprep.subr.mxu0 0.0
        %1813 = vmatpush1.msra.mxu0 0.0
        %1814 = vmatprep.subr.mxu0 0.0
        %1815 = vmatpush1.msra.mxu0 0.0
        %1816 = vmatprep.subr.mxu0 0.0
        %1817 = vmatpush1.msra.mxu0 0.0
        %1818 = vmatprep.subr.mxu0 0.0
        %1819 = vmatpush1.msra.mxu0 0.0
        %1820 = vmatprep.subr.mxu0 0.0
        %1821 = vmatpush1.msra.mxu0 0.0
        %1822 = vmatprep.subr.mxu0 0.0
        %1823 = vmatpush1.msra.mxu0 0.0
        %1824 = vmatprep.subr.mxu0 0.0
        %1825 = vmatpush1.msra.mxu0 0.0
        %1826 = vmatprep.subr.mxu0 0.0
        %1827 = vmatpush1.msra.mxu0 0.0
        %1828 = vmatprep.subr.mxu0 0.0
        %1829 = vmatpush1.msra.mxu0 0.0
        %1830 = vmatprep.subr.mxu0 0.0
        %1831 = vmatpush1.msra.mxu0 0.0
        %1832 = vmatprep.subr.mxu0 0.0
        %1833 = vmatpush1.msra.mxu0 0.0
        %1834 = vmatprep.subr.mxu0 0.0
        %1835 = vmatpush1.msra.mxu0 0.0
        %1836 = vmatprep.subr.mxu0 0.0
        %1837 = vmatpush1.msra.mxu0 0.0
        %1838 = vmatprep.subr.mxu0 0.0
        %1839 = vmatpush1.msra.mxu0 0.0
        %1840 = vmatprep.subr.mxu0 0.0
        %1841 = vmatpush1.msra.mxu0 0.0
        %1842 = vmatprep.subr.mxu0 0.0
        %1843 = vmatpush1.msra.mxu0 0.0
        %1844 = vmatprep.subr.mxu0 0.0
        %1845 = vmatpush1.msra.mxu0 0.0
        %1846 = vmatprep.subr.mxu0 0.0
        %1847 = vmatpush1.msra.mxu0 0.0
        %1848 = vmatprep.subr.mxu0 0.0
        %1849 = vmatpush1.msra.mxu0 0.0
        %1850 = vmatprep.subr.mxu0 0.0
        %1851 = vmatpush1.msra.mxu0 0.0
        %1852 = vmatprep.subr.mxu0 0.0
        %1853 = vmatpush1.msra.mxu0 0.0
        %1854 = vmatprep.mubr.f32.mxu0 0.0
        %1855 = vmatmul.mubr.f32.gmra.mrb[0].mxu0 %v1788
        %v1856 = vpop.f32.mrb[0].mxu0
        %v1857 = vadd.f32 0.0, %v1856
        %v1858 = vpop.f32.mrb[0].mxu0
        %1859 = vdwg.mxu0
        %v1860 = vld [vmem:[%s3] sm:$0xff]
        %v1861 = vld [vmem:[%s3 + $0x8] sm:$0xff]
        %v1862 = vld [vmem:[%s3 + $0x10] sm:$0xff]
        %v1863 = vld [vmem:[%s3 + $0x18] sm:$0xff]
        %v1865 = vsel %vm1219, %v1638, 0
        %1867 = vmatprep.subr.mxu0 0.0
        %1868 = vmatpush1.msra.mxu0 %v1860
        %1869 = vmatprep.subr.mxu0 0.0
        %1870 = vmatpush1.msra.mxu0 0.0
        %1871 = vmatprep.subr.mxu0 0.0
        %1872 = vmatpush1.msra.mxu0 0.0
        %1873 = vmatprep.subr.mxu0 0.0
        %1874 = vmatpush1.msra.mxu0 0.0
        %1875 = vmatprep.subr.mxu0 0.0
        %1876 = vmatpush1.msra.mxu0 0.0
        %1877 = vmatprep.subr.mxu0 0.0
        %1878 = vmatpush1.msra.mxu0 0.0
        %1879 = vmatprep.subr.mxu0 0.0
        %1880 = vmatpush1.msra.mxu0 0.0
        %1881 = vmatprep.subr.mxu0 0.0
        %1882 = vmatpush1.msra.mxu0 0.0
        %1883 = vmatprep.subr.mxu0 0.0
        %1884 = vmatpush1.msra.mxu0 0.0
        %1885 = vmatprep.subr.mxu0 0.0
        %1886 = vmatpush1.msra.mxu0 0.0
        %1887 = vmatprep.subr.mxu0 0.0
        %1888 = vmatpush1.msra.mxu0 0.0
        %1889 = vmatprep.subr.mxu0 0.0
        %1890 = vmatpush1.msra.mxu0 0.0
        %1891 = vmatprep.subr.mxu0 0.0
        %1892 = vmatpush1.msra.mxu0 0.0
        %1893 = vmatprep.subr.mxu0 0.0
        %1894 = vmatpush1.msra.mxu0 0.0
        %1895 = vmatprep.subr.mxu0 0.0
        %1896 = vmatpush1.msra.mxu0 0.0
        %1897 = vmatprep.subr.mxu0 0.0
        %1898 = vmatpush1.msra.mxu0 0.0
        %1899 = vmatprep.subr.mxu0 0.0
        %1900 = vmatpush1.msra.mxu0 0.0
        %1901 = vmatprep.subr.mxu0 0.0
        %1902 = vmatpush1.msra.mxu0 0.0
        %1903 = vmatprep.subr.mxu0 0.0
        %1904 = vmatpush1.msra.mxu0 0.0
        %1905 = vmatprep.subr.mxu0 0.0
        %1906 = vmatpush1.msra.mxu0 0.0
        %1907 = vmatprep.subr.mxu0 0.0
        %1908 = vmatpush1.msra.mxu0 0.0
        %1909 = vmatprep.subr.mxu0 0.0
        %1910 = vmatpush1.msra.mxu0 0.0
        %1911 = vmatprep.subr.mxu0 0.0
        %1912 = vmatpush1.msra.mxu0 0.0
        %1913 = vmatprep.subr.mxu0 0.0
        %1914 = vmatpush1.msra.mxu0 0.0
        %1915 = vmatprep.subr.mxu0 0.0
        %1916 = vmatpush1.msra.mxu0 0.0
        %1917 = vmatprep.subr.mxu0 0.0
        %1918 = vmatpush1.msra.mxu0 0.0
        %1919 = vmatprep.subr.mxu0 0.0
        %1920 = vmatpush1.msra.mxu0 0.0
        %1921 = vmatprep.subr.mxu0 0.0
        %1922 = vmatpush1.msra.mxu0 0.0
        %1923 = vmatprep.subr.mxu0 0.0
        %1924 = vmatpush1.msra.mxu0 0.0
        %1925 = vmatprep.subr.mxu0 0.0
        %1926 = vmatpush1.msra.mxu0 0.0
        %1927 = vmatprep.subr.mxu0 0.0
        %1928 = vmatpush1.msra.mxu0 0.0
        %1929 = vmatprep.subr.mxu0 0.0
        %1930 = vmatpush1.msra.mxu0 0.0
        %1931 = vmatprep.mubr.f32.mxu0 0.0
        %1932 = vmatmul.mubr.f32.gmra.mrb[0].mxu0 %v1865
        %v1933 = vpop.f32.mrb[0].mxu0
        %v1934 = vadd.f32 0.0, %v1933
        %v1935 = vpop.f32.mrb[0].mxu0
        %1936 = vdwg.mxu0
        %v1938 = vsel %vm1219, %v1711, 0
        %1940 = vmatprep.subr.mxu0 0.0
        %1941 = vmatpush1.msra.mxu0 %v1861
        %1942 = vmatprep.subr.mxu0 0.0
        %1943 = vmatpush1.msra.mxu0 0.0
        %1944 = vmatprep.subr.mxu0 0.0
        %1945 = vmatpush1.msra.mxu0 0.0
        %1946 = vmatprep.subr.mxu0 0.0
        %1947 = vmatpush1.msra.mxu0 0.0
        %1948 = vmatprep.subr.mxu0 0.0
        %1949 = vmatpush1.msra.mxu0 0.0
        %1950 = vmatprep.subr.mxu0 0.0
        %1951 = vmatpush1.msra.mxu0 0.0
        %1952 = vmatprep.subr.mxu0 0.0
        %1953 = vmatpush1.msra.mxu0 0.0
        %1954 = vmatprep.subr.mxu0 0.0
        %1955 = vmatpush1.msra.mxu0 0.0
        %1956 = vmatprep.subr.mxu0 0.0
        %1957 = vmatpush1.msra.mxu0 0.0
        %1958 = vmatprep.subr.mxu0 0.0
        %1959 = vmatpush1.msra.mxu0 0.0
        %1960 = vmatprep.subr.mxu0 0.0
        %1961 = vmatpush1.msra.mxu0 0.0
        %1962 = vmatprep.subr.mxu0 0.0
        %1963 = vmatpush1.msra.mxu0 0.0
        %1964 = vmatprep.subr.mxu0 0.0
        %1965 = vmatpush1.msra.mxu0 0.0
        %1966 = vmatprep.subr.mxu0 0.0
        %1967 = vmatpush1.msra.mxu0 0.0
        %1968 = vmatprep.subr.mxu0 0.0
        %1969 = vmatpush1.msra.mxu0 0.0
        %1970 = vmatprep.subr.mxu0 0.0
        %1971 = vmatpush1.msra.mxu0 0.0
        %1972 = vmatprep.subr.mxu0 0.0
        %1973 = vmatpush1.msra.mxu0 0.0
        %1974 = vmatprep.subr.mxu0 0.0
        %1975 = vmatpush1.msra.mxu0 0.0
        %1976 = vmatprep.subr.mxu0 0.0
        %1977 = vmatpush1.msra.mxu0 0.0
        %1978 = vmatprep.subr.mxu0 0.0
        %1979 = vmatpush1.msra.mxu0 0.0
        %1980 = vmatprep.subr.mxu0 0.0
        %1981 = vmatpush1.msra.mxu0 0.0
        %1982 = vmatprep.subr.mxu0 0.0
        %1983 = vmatpush1.msra.mxu0 0.0
        %1984 = vmatprep.subr.mxu0 0.0
        %1985 = vmatpush1.msra.mxu0 0.0
        %1986 = vmatprep.subr.mxu0 0.0
        %1987 = vmatpush1.msra.mxu0 0.0
        %1988 = vmatprep.subr.mxu0 0.0
        %1989 = vmatpush1.msra.mxu0 0.0
        %1990 = vmatprep.subr.mxu0 0.0
        %1991 = vmatpush1.msra.mxu0 0.0
        %1992 = vmatprep.subr.mxu0 0.0
        %1993 = vmatpush1.msra.mxu0 0.0
        %1994 = vmatprep.subr.mxu0 0.0
        %1995 = vmatpush1.msra.mxu0 0.0
        %1996 = vmatprep.subr.mxu0 0.0
        %1997 = vmatpush1.msra.mxu0 0.0
        %1998 = vmatprep.subr.mxu0 0.0
        %1999 = vmatpush1.msra.mxu0 0.0
        %2000 = vmatprep.subr.mxu0 0.0
        %2001 = vmatpush1.msra.mxu0 0.0
        %2002 = vmatprep.subr.mxu0 0.0
        %2003 = vmatpush1.msra.mxu0 0.0
        %2004 = vmatprep.mubr.f32.mxu0 0.0
        %2005 = vmatmul.mubr.f32.gmra.mrb[0].mxu0 %v1938
        %v2006 = vpop.f32.mrb[0].mxu0
        %v2007 = vadd.f32 0.0, %v2006
        %v2008 = vpop.f32.mrb[0].mxu0
        %2009 = vdwg.mxu0
        %v2011 = vsel %vm1219, %v1784, 0
        %2013 = vmatprep.subr.mxu0 0.0
        %2014 = vmatpush1.msra.mxu0 %v1862
        %2015 = vmatprep.subr.mxu0 0.0
        %2016 = vmatpush1.msra.mxu0 0.0
        %2017 = vmatprep.subr.mxu0 0.0
        %2018 = vmatpush1.msra.mxu0 0.0
        %2019 = vmatprep.subr.mxu0 0.0
        %2020 = vmatpush1.msra.mxu0 0.0
        %2021 = vmatprep.subr.mxu0 0.0
        %2022 = vmatpush1.msra.mxu0 0.0
        %2023 = vmatprep.subr.mxu0 0.0
        %2024 = vmatpush1.msra.mxu0 0.0
        %2025 = vmatprep.subr.mxu0 0.0
        %2026 = vmatpush1.msra.mxu0 0.0
        %2027 = vmatprep.subr.mxu0 0.0
        %2028 = vmatpush1.msra.mxu0 0.0
        %2029 = vmatprep.subr.mxu0 0.0
        %2030 = vmatpush1.msra.mxu0 0.0
        %2031 = vmatprep.subr.mxu0 0.0
        %2032 = vmatpush1.msra.mxu0 0.0
        %2033 = vmatprep.subr.mxu0 0.0
        %2034 = vmatpush1.msra.mxu0 0.0
        %2035 = vmatprep.subr.mxu0 0.0
        %2036 = vmatpush1.msra.mxu0 0.0
        %2037 = vmatprep.subr.mxu0 0.0
        %2038 = vmatpush1.msra.mxu0 0.0
        %2039 = vmatprep.subr.mxu0 0.0
        %2040 = vmatpush1.msra.mxu0 0.0
        %2041 = vmatprep.subr.mxu0 0.0
        %2042 = vmatpush1.msra.mxu0 0.0
        %2043 = vmatprep.subr.mxu0 0.0
        %2044 = vmatpush1.msra.mxu0 0.0
        %2045 = vmatprep.subr.mxu0 0.0
        %2046 = vmatpush1.msra.mxu0 0.0
        %2047 = vmatprep.subr.mxu0 0.0
        %2048 = vmatpush1.msra.mxu0 0.0
        %2049 = vmatprep.subr.mxu0 0.0
        %2050 = vmatpush1.msra.mxu0 0.0
        %2051 = vmatprep.subr.mxu0 0.0
        %2052 = vmatpush1.msra.mxu0 0.0
        %2053 = vmatprep.subr.mxu0 0.0
        %2054 = vmatpush1.msra.mxu0 0.0
        %2055 = vmatprep.subr.mxu0 0.0
        %2056 = vmatpush1.msra.mxu0 0.0
        %2057 = vmatprep.subr.mxu0 0.0
        %2058 = vmatpush1.msra.mxu0 0.0
        %2059 = vmatprep.subr.mxu0 0.0
        %2060 = vmatpush1.msra.mxu0 0.0
        %2061 = vmatprep.subr.mxu0 0.0
        %2062 = vmatpush1.msra.mxu0 0.0
        %2063 = vmatprep.subr.mxu0 0.0
        %2064 = vmatpush1.msra.mxu0 0.0
        %2065 = vmatprep.subr.mxu0 0.0
        %2066 = vmatpush1.msra.mxu0 0.0
        %2067 = vmatprep.subr.mxu0 0.0
        %2068 = vmatpush1.msra.mxu0 0.0
        %2069 = vmatprep.subr.mxu0 0.0
        %2070 = vmatpush1.msra.mxu0 0.0
        %2071 = vmatprep.subr.mxu0 0.0
        %2072 = vmatpush1.msra.mxu0 0.0
        %2073 = vmatprep.subr.mxu0 0.0
        %2074 = vmatpush1.msra.mxu0 0.0
        %2075 = vmatprep.subr.mxu0 0.0
        %2076 = vmatpush1.msra.mxu0 0.0
        %2077 = vmatprep.mubr.f32.mxu0 0.0
        %2078 = vmatmul.mubr.f32.gmra.mrb[0].mxu0 %v2011
        %v2079 = vpop.f32.mrb[0].mxu0
        %v2080 = vadd.f32 0.0, %v2079
        %v2081 = vpop.f32.mrb[0].mxu0
        %2082 = vdwg.mxu0
        %v2084 = vsel %vm1219, %v1857, 0
        %2086 = vmatprep.subr.mxu0 0.0
        %2087 = vmatpush1.msra.mxu0 %v1863
        %2088 = vmatprep.subr.mxu0 0.0
        %2089 = vmatpush1.msra.mxu0 0.0
        %2090 = vmatprep.subr.mxu0 0.0
        %2091 = vmatpush1.msra.mxu0 0.0
        %2092 = vmatprep.subr.mxu0 0.0
        %2093 = vmatpush1.msra.mxu0 0.0
        %2094 = vmatprep.subr.mxu0 0.0
        %2095 = vmatpush1.msra.mxu0 0.0
        %2096 = vmatprep.subr.mxu0 0.0
        %2097 = vmatpush1.msra.mxu0 0.0
        %2098 = vmatprep.subr.mxu0 0.0
        %2099 = vmatpush1.msra.mxu0 0.0
        %2100 = vmatprep.subr.mxu0 0.0
        %2101 = vmatpush1.msra.mxu0 0.0
        %2102 = vmatprep.subr.mxu0 0.0
        %2103 = vmatpush1.msra.mxu0 0.0
        %2104 = vmatprep.subr.mxu0 0.0
        %2105 = vmatpush1.msra.mxu0 0.0
        %2106 = vmatprep.subr.mxu0 0.0
        %2107 = vmatpush1.msra.mxu0 0.0
        %2108 = vmatprep.subr.mxu0 0.0
        %2109 = vmatpush1.msra.mxu0 0.0
        %2110 = vmatprep.subr.mxu0 0.0
        %2111 = vmatpush1.msra.mxu0 0.0
        %2112 = vmatprep.subr.mxu0 0.0
        %2113 = vmatpush1.msra.mxu0 0.0
        %2114 = vmatprep.subr.mxu0 0.0
        %2115 = vmatpush1.msra.mxu0 0.0
        %2116 = vmatprep.subr.mxu0 0.0
        %2117 = vmatpush1.msra.mxu0 0.0
        %2118 = vmatprep.subr.mxu0 0.0
        %2119 = vmatpush1.msra.mxu0 0.0
        %2120 = vmatprep.subr.mxu0 0.0
        %2121 = vmatpush1.msra.mxu0 0.0
        %2122 = vmatprep.subr.mxu0 0.0
        %2123 = vmatpush1.msra.mxu0 0.0
        %2124 = vmatprep.subr.mxu0 0.0
        %2125 = vmatpush1.msra.mxu0 0.0
        %2126 = vmatprep.subr.mxu0 0.0
        %2127 = vmatpush1.msra.mxu0 0.0
        %2128 = vmatprep.subr.mxu0 0.0
        %2129 = vmatpush1.msra.mxu0 0.0
        %2130 = vmatprep.subr.mxu0 0.0
        %2131 = vmatpush1.msra.mxu0 0.0
        %2132 = vmatprep.subr.mxu0 0.0
        %2133 = vmatpush1.msra.mxu0 0.0
        %2134 = vmatprep.subr.mxu0 0.0
        %2135 = vmatpush1.msra.mxu0 0.0
        %2136 = vmatprep.subr.mxu0 0.0
        %2137 = vmatpush1.msra.mxu0 0.0
        %2138 = vmatprep.subr.mxu0 0.0
        %2139 = vmatpush1.msra.mxu0 0.0
        %2140 = vmatprep.subr.mxu0 0.0
        %2141 = vmatpush1.msra.mxu0 0.0
        %2142 = vmatprep.subr.mxu0 0.0
        %2143 = vmatpush1.msra.mxu0 0.0
        %2144 = vmatprep.subr.mxu0 0.0
        %2145 = vmatpush1.msra.mxu0 0.0
        %2146 = vmatprep.subr.mxu0 0.0
        %2147 = vmatpush1.msra.mxu0 0.0
        %2148 = vmatprep.subr.mxu0 0.0
        %2149 = vmatpush1.msra.mxu0 0.0
        %2150 = vmatprep.mubr.f32.mxu0 0.0
        %2151 = vmatmul.mubr.f32.gmra.mrb[0].mxu0 %v2084
        %v2152 = vpop.f32.mrb[0].mxu0
        %v2153 = vadd.f32 0.0, %v2152
        %v2154 = vpop.f32.mrb[0].mxu0
        %2155 = vdwg.mxu0
        %v2156 = vsel %vm365, %v1934, 0.0
        %v2157 = vsel %vm365, %v2007, 0.0
        %v2158 = vadd.f32 %v2156, %v2157
        %v2159 = vsel %vm365, %v2080, 0.0
        %v2160 = vadd.f32 %v2158, %v2159
        %v2161 = vsel %vm365, %v2153, 0.0
        %v2162 = vadd.f32 %v2160, %v2161
        %v2163 = vadd.f32 %v2162, %v315
        %v2164 = vsel %vm365, %v2163, 0.0
        %2165 = vadd.xlane.f32.xlu0 %v2164
        %v2166 = vpop.xlane.xlu0 %2165
        %v2167 = vrcp.pop 32.0
        %v2168 = vmul.f32 %v2166, %v2167
        %v2169 = vsub.f32 %v2163, %v2168
        %v2170 = vmul.f32 %v2169, %v2169
        %v2171 = vsel %vm365, %v2170, 0.0
        %2172 = vadd.xlane.f32.xlu0 %v2171
        %v2173 = vpop.xlane.xlu0 %2172
        %v2174 = vmul.f32 %v2173, %v2167
        %v2175 = vadd.f32 %v2174, 1e-05
        %v2176 = vrsqrt.pop %v2175
        %v2177 = vmul.f32 %v2169, %v2176
        %v2178 = vld [vmem:[%s4] sm:$0xff]
        %v2179 = vld [vmem:[%s4 + $0x8] sm:$0xff]
        %v2180 = vld [vmem:[%s4 + $0x10] sm:$0xff]
        %v2181 = vld [vmem:[%s4 + $0x18] sm:$0xff]
        %v2182 = vld [vmem:[%s5] sm:$0x1]
        %v2184 = vlaneseq
        %v2185 = vshrl.u32 %v2184, 7
        %v2186 = vsub.s32 0, %v2185
        %v2187 = vrot.slane %v2182, %v2186
        %v2190 = vsel %vm365, %v2177, 0
        %2192 = vmatprep.subr.mxu0 0.0
        %2193 = vmatpush1.msra.mxu0 %v2178
        %2194 = vmatprep.subr.mxu0 0.0
        %2195 = vmatpush1.msra.mxu0 %v2179
        %2196 = vmatprep.subr.mxu0 0.0
        %2197 = vmatpush1.msra.mxu0 %v2180
        %2198 = vmatprep.subr.mxu0 0.0
        %2199 = vmatpush1.msra.mxu0 %v2181
        %2200 = vmatprep.subr.mxu0 0.0
        %2201 = vmatpush1.msra.mxu0 0.0
        %2202 = vmatprep.subr.mxu0 0.0
        %2203 = vmatpush1.msra.mxu0 0.0
        %2204 = vmatprep.subr.mxu0 0.0
        %2205 = vmatpush1.msra.mxu0 0.0
        %2206 = vmatprep.subr.mxu0 0.0
        %2207 = vmatpush1.msra.mxu0 0.0
        %2208 = vmatprep.subr.mxu0 0.0
        %2209 = vmatpush1.msra.mxu0 0.0
        %2210 = vmatprep.subr.mxu0 0.0
        %2211 = vmatpush1.msra.mxu0 0.0
        %2212 = vmatprep.subr.mxu0 0.0
        %2213 = vmatpush1.msra.mxu0 0.0
        %2214 = vmatprep.subr.mxu0 0.0
        %2215 = vmatpush1.msra.mxu0 0.0
        %2216 = vmatprep.subr.mxu0 0.0
        %2217 = vmatpush1.msra.mxu0 0.0
        %2218 = vmatprep.subr.mxu0 0.0
        %2219 = vmatpush1.msra.mxu0 0.0
        %2220 = vmatprep.subr.mxu0 0.0
        %2221 = vmatpush1.msra.mxu0 0.0
        %2222 = vmatprep.subr.mxu0 0.0
        %2223 = vmatpush1.msra.mxu0 0.0
        %2224 = vmatprep.subr.mxu0 0.0
        %2225 = vmatpush1.msra.mxu0 0.0
        %2226 = vmatprep.subr.mxu0 0.0
        %2227 = vmatpush1.msra.mxu0 0.0
        %2228 = vmatprep.subr.mxu0 0.0
        %2229 = vmatpush1.msra.mxu0 0.0
        %2230 = vmatprep.subr.mxu0 0.0
        %2231 = vmatpush1.msra.mxu0 0.0
        %2232 = vmatprep.subr.mxu0 0.0
        %2233 = vmatpush1.msra.mxu0 0.0
        %2234 = vmatprep.subr.mxu0 0.0
        %2235 = vmatpush1.msra.mxu0 0.0
        %2236 = vmatprep.subr.mxu0 0.0
        %2237 = vmatpush1.msra.mxu0 0.0
        %2238 = vmatprep.subr.mxu0 0.0
        %2239 = vmatpush1.msra.mxu0 0.0
        %2240 = vmatprep.subr.mxu0 0.0
        %2241 = vmatpush1.msra.mxu0 0.0
        %2242 = vmatprep.subr.mxu0 0.0
        %2243 = vmatpush1.msra.mxu0 0.0
        %2244 = vmatprep.subr.mxu0 0.0
        %2245 = vmatpush1.msra.mxu0 0.0
        %2246 = vmatprep.subr.mxu0 0.0
        %2247 = vmatpush1.msra.mxu0 0.0
        %2248 = vmatprep.subr.mxu0 0.0
        %2249 = vmatpush1.msra.mxu0 0.0
        %2250 = vmatprep.subr.mxu0 0.0
        %2251 = vmatpush1.msra.mxu0 0.0
        %2252 = vmatprep.subr.mxu0 0.0
        %2253 = vmatpush1.msra.mxu0 0.0
        %2254 = vmatprep.subr.mxu0 0.0
        %2255 = vmatpush1.msra.mxu0 0.0
        %2256 = vmatprep.mubr.f32.mxu0 0.0
        %2257 = vmatmul.mubr.f32.gmra.mrb[0].mxu0 %v2190
        %v2258 = vpop.f32.mrb[0].mxu0
        %v2259 = vadd.f32 %v2187, %v2258
        %v2260 = vpop.f32.mrb[0].mxu0
        %2261 = vdwg.mxu0
        %v2262 = vmax.f32 %v2259, 0.0
        %v2263 = vld [vmem:[%s6] sm:$0xff]
        %v2264 = vld [vmem:[%s6 + $0x8] sm:$0xff]
        %v2265 = vld [vmem:[%s6 + $0x10] sm:$0xff]
        %v2266 = vld [vmem:[%s6 + $0x18] sm:$0xff]
        %v2267 = vld [vmem:[%s6 + $0x20] sm:$0xff]
        %v2268 = vld [vmem:[%s6 + $0x28] sm:$0xff]
        %v2269 = vld [vmem:[%s6 + $0x30] sm:$0xff]
        %v2270 = vld [vmem:[%s6 + $0x38] sm:$0xff]
        %v2271 = vld [vmem:[%s7] sm:$0x1]
        %v2273 = vlaneseq
        %v2274 = vshrl.u32 %v2273, 7
        %v2275 = vsub.s32 0, %v2274
        %v2276 = vrot.slane %v2271, %v2275
        %vm2278 = vcmask 523264
        %v2280 = vsel %vm2278, %v2262, 0
        %2282 = vmatprep.subr.mxu0 0.0
        %2283 = vmatpush1.msra.mxu0 %v2263
        %2284 = vmatprep.subr.mxu0 0.0
        %2285 = vmatpush1.msra.mxu0 %v2264
        %2286 = vmatprep.subr.mxu0 0.0
        %2287 = vmatpush1.msra.mxu0 %v2265
        %2288 = vmatprep.subr.mxu0 0.0
        %2289 = vmatpush1.msra.mxu0 %v2266
        %2290 = vmatprep.subr.mxu0 0.0
        %2291 = vmatpush1.msra.mxu0 %v2267
        %2292 = vmatprep.subr.mxu0 0.0
        %2293 = vmatpush1.msra.mxu0 %v2268
        %2294 = vmatprep.subr.mxu0 0.0
        %2295 = vmatpush1.msra.mxu0 %v2269
        %2296 = vmatprep.subr.mxu0 0.0
        %2297 = vmatpush1.msra.mxu0 %v2270
        %2298 = vmatprep.subr.mxu0 0.0
        %2299 = vmatpush1.msra.mxu0 0.0
        %2300 = vmatprep.subr.mxu0 0.0
        %2301 = vmatpush1.msra.mxu0 0.0
        %2302 = vmatprep.subr.mxu0 0.0
        %2303 = vmatpush1.msra.mxu0 0.0
        %2304 = vmatprep.subr.mxu0 0.0
        %2305 = vmatpush1.msra.mxu0 0.0
        %2306 = vmatprep.subr.mxu0 0.0
        %2307 = vmatpush1.msra.mxu0 0.0
        %2308 = vmatprep.subr.mxu0 0.0
        %2309 = vmatpush1.msra.mxu0 0.0
        %2310 = vmatprep.subr.mxu0 0.0
        %2311 = vmatpush1.msra.mxu0 0.0
        %2312 = vmatprep.subr.mxu0 0.0
        %2313 = vmatpush1.msra.mxu0 0.0
        %2314 = vmatprep.subr.mxu0 0.0
        %2315 = vmatpush1.msra.mxu0 0.0
        %2316 = vmatprep.subr.mxu0 0.0
        %2317 = vmatpush1.msra.mxu0 0.0
        %2318 = vmatprep.subr.mxu0 0.0
        %2319 = vmatpush1.msra.mxu0 0.0
        %2320 = vmatprep.subr.mxu0 0.0
        %2321 = vmatpush1.msra.mxu0 0.0
        %2322 = vmatprep.subr.mxu0 0.0
        %2323 = vmatpush1.msra.mxu0 0.0
        %2324 = vmatprep.subr.mxu0 0.0
        %2325 = vmatpush1.msra.mxu0 0.0
        %2326 = vmatprep.subr.mxu0 0.0
        %2327 = vmatpush1.msra.mxu0 0.0
        %2328 = vmatprep.subr.mxu0 0.0
        %2329 = vmatpush1.msra.mxu0 0.0
        %2330 = vmatprep.subr.mxu0 0.0
        %2331 = vmatpush1.msra.mxu0 0.0
        %2332 = vmatprep.subr.mxu0 0.0
        %2333 = vmatpush1.msra.mxu0 0.0
        %2334 = vmatprep.subr.mxu0 0.0
        %2335 = vmatpush1.msra.mxu0 0.0
        %2336 = vmatprep.subr.mxu0 0.0
        %2337 = vmatpush1.msra.mxu0 0.0
        %2338 = vmatprep.subr.mxu0 0.0
        %2339 = vmatpush1.msra.mxu0 0.0
        %2340 = vmatprep.subr.mxu0 0.0
        %2341 = vmatpush1.msra.mxu0 0.0
        %2342 = vmatprep.subr.mxu0 0.0
        %2343 = vmatpush1.msra.mxu0 0.0
        %2344 = vmatprep.subr.mxu0 0.0
        %2345 = vmatpush1.msra.mxu0 0.0
        %2346 = vmatprep.mubr.f32.mxu0 0.0
        %2347 = vmatmul.mubr.f32.gmra.mrb[0].mxu0 %v2280
        %v2348 = vpop.f32.mrb[0].mxu0
        %v2349 = vadd.f32 %v2276, %v2348
        %v2350 = vpop.f32.mrb[0].mxu0
        %2351 = vdwg.mxu0
        %v2352 = vadd.f32 %v2349, %v2177
        %v2353 = vsel %vm365, %v2352, 0.0
        %2354 = vadd.xlane.f32.xlu0 %v2353
        %v2355 = vpop.xlane.xlu0 %2354
        %v2356 = vmul.f32 %v2355, %v2167
        %v2357 = vsub.f32 %v2352, %v2356
        %v2358 = vmul.f32 %v2357, %v2357
        %v2359 = vsel %vm365, %v2358, 0.0
        %2360 = vadd.xlane.f32.xlu0 %v2359
        %v2361 = vpop.xlane.xlu0 %2360
        %v2362 = vmul.f32 %v2361, %v2167
        %v2363 = vadd.f32 %v2362, 1e-05
        %v2364 = vrsqrt.pop %v2363
        %v2365 = vmul.f32 %v2357, %v2364
        %2366 = vst.msk [vmem:[%s307] sm:$0xff] %vm365, %v2365
        %s2367 = sand.u32 %s208, 1
        %s2368 = scalar_lea.sflag [#allocation3], %s2367
        %s2369 = sand.u32 %s208, 1
        %s2370 = smul.addr %s2369, 8
        %s2371 = scalar_lea.vmem [#allocation2], %s2370
        // Predicated region
        $region53: #{transformer_layer.1} parent=51 // pred_check
          %p2372 = pneg %p218
        $region54: #{transformer_layer.1} parent=51 // pred_check_branch
          %2374 = sbr.rel (%p2372) target = $region56
        $region55: #{transformer_layer.1} parent=51 // pred_region
          %s2376 = ssub.s32 128, 128
          %2377 = vsyncadd %s2368, %s2376
          %s2378 = smul.addr %s22, 128
          %s2379 = scalar_lea.hbm %s8, %s2378
          %s2381 = sshll.u32 %s2371, 4
          %s2382 = int_to_ptr.vmem [resolvable:$true] %s2381
          %2384 = dma.vmem_to_hbm [thread:$0]  %s2382, 128, %s2379, %s2368
        $region56: #{transformer_layer.1} parent=51 // pred_fallthru
          _
      $region52: #{transformer_layer.1} parent=5 // pred_fallthru
        _
      %p2385 = scmp.le.s32.totalorder 2, %s17
      // Predicated region
      $region57: #{transformer_layer.1} parent=5 // pred_check
        %p2386 = pneg %p2385
      $region58: #{transformer_layer.1} parent=5 // pred_check_branch
        %2388 = sbr.rel (%p2386) target = $region60
      $region59: #{transformer_layer.1} parent=5 // pred_region
        %s2389 = ssub.s32 %s17, 2
        // Predicated region
        $region61: #{transformer_layer.1} parent=59 // pred_check
          %p2390 = pneg %p224
        $region62: #{transformer_layer.1} parent=59 // pred_check_branch
          %2392 = sbr.rel (%p2390) target = $region64
        $region63: #{transformer_layer.1} parent=59 // pred_region
          %s2393 = sand.u32 %s209, 1
          %s2394 = scalar_lea.sflag [#allocation3], %s2393
          %s2395 = sand.u32 %s209, 1
          %s2396 = smul.addr %s2395, 8
          %s2397 = scalar_lea.vmem [#allocation2], %s2396
          %2398 = dma.done %s2394, 128
        $region64: #{transformer_layer.1} parent=59 // pred_fallthru
          _
      $region60: #{transformer_layer.1} parent=5 // pred_fallthru
        _
    $region6: #{transformer_layer.1} parent=1 // loop_footer
      %s21 = sadd.s32 1, %s17
    $region7: #{transformer_layer.1} parent=1 // loop_footer_branch
      %16 = sbr.rel target = $region3
    $region8: #{transformer_layer.1} parent=1 // loop_exit
      _
    %2399 = vsyncpa [#allocation3], 1
    %s2400 = scalar_lea.sflag [#allocation3], 1
    %2401 = vsyncpa %s2400, 1

</llo_original>
